<compile_context>
chip_gen: v7x
topology: tpu7x:2x2x1
jax: 0.10.0
libtpu: 0.0.40
codegen_flags: <defaults>
</compile_context>

<pallas_src>
import functools

import jax
import jax.numpy as jnp
from jax.experimental import pallas as pl
from jax.experimental.pallas import tpu as pltpu


def _round_up(n, m):
    return (n + m - 1) // m * m


def _fm_kernel(bias_ref, thi_ref, tlo_ref, x_ref, out_ref, *, num_fields, emb_dim):
    """Fused table-lookup + FM reduction for one batch tile.

    bias_ref: SMEM (1,)            global bias (f32)
    thi_ref : VMEM (V_pad, D_aug)  bf16 high half of augmented table (resident)
    tlo_ref : VMEM (V_pad, D_aug)  bf16 residual half of augmented table (resident)
    x_ref   : VMEM (TB, F)         int32 feature indices
    out_ref : VMEM (TB, 1)         f32 sigmoid predictions
    """
    tb = x_ref.shape[0]
    v_pad = thi_ref.shape[0]

    x = x_ref[...]                                                  # (TB, F) int32
    iota = jax.lax.broadcasted_iota(jnp.int32, (tb, v_pad), 1)

    # Per-example vocab-id multiplicities ("one-hot sum"); counts <= F are exact in bf16.
    cnt = jnp.zeros((tb, v_pad), jnp.float32)
    for f in range(num_fields):                                     # static unroll, F is small
        cnt = cnt + jnp.where(x[:, f:f + 1] == iota, 1.0, 0.0)
    cnt_bf = cnt.astype(jnp.bfloat16)

    # Fused gather-and-reduce on the MXU. Augmented-table column layout:
    #   [:, :D]  = embedding            -> res[:, :D]  = sum_f v_{bfd}      (field sum)
    #   [:, D]   = rowwise sum of emb^2 -> res[:, D]   = sum_f sum_d v^2
    #   [:, D+1] = first-order weight   -> res[:, D+1] = sum_f w_{x_bf}
    # Two bf16 matmuls (hi + residual) reproduce the f32 table to ~2^-18 rel error,
    # without relying on f32-MXU precision behaviour.
    res = (jnp.dot(cnt_bf, thi_ref[...], preferred_element_type=jnp.float32) +
           jnp.dot(cnt_bf, tlo_ref[...], preferred_element_type=jnp.float32))

    d = emb_dim
    s = res[:, :d]                                                  # (TB, D)
    sum_sq = res[:, d:d + 1]                                        # (TB, 1)
    lin_sum = res[:, d + 1:d + 2]                                   # (TB, 1)

    inter = 0.5 * (jnp.sum(s * s, axis=-1, keepdims=True) - sum_sq)
    logit = lin_sum + bias_ref[0] + inter
    out_ref[...] = jax.nn.sigmoid(logit).astype(out_ref.dtype)


def _pick_batch_tile(b_pad):
    """Largest tile <= 2048 dividing b_pad, preferring >= 4 grid steps (v7x megacore
    needs >= 2 steps per TensorCore to double-buffer), then >= 2 steps, then any."""
    candidates = (2048, 1024, 512, 256, 128)
    for want_steps in (4, 2, 1):
        for tb in candidates:
            if b_pad % tb == 0 and b_pad // tb >= want_steps:
                return tb
    return b_pad


def fm_pallas(X, aug_hi, aug_lo, bias, num_fields, emb_dim, *, batch_tile=None):
    """FM hot path: fused lookup + FM reduction in one Pallas TPU kernel.

    Args:
      X:       (B, F) int32 feature indices.
      aug_hi:  (V_pad, D_aug) bf16 high half of the augmented table.
      aug_lo:  (V_pad, D_aug) bf16 residual half of the augmented table.
      bias:    (1,) f32 global bias.
    Returns:
      y_pred: (B, 1) f32 sigmoid predictions.
    """
    B, F = X.shape
    assert F == num_fields
    V_pad, D_aug = aug_hi.shape
    assert aug_lo.shape == (V_pad, D_aug)

    # Resident-table VMEM budget (both halves x double-buffer). Tiny here (~128 KiB);
    # guard so a huge production vocab doesn't silently blow v7x's smaller VMEM.
    table_vmem = 2 * 2 * V_pad * D_aug * 2
    assert table_vmem <= (8 << 20), "vocab too large for a VMEM-resident table"
    # TODO(synk): for very large vocabularies keep the table in pl.ANY/HBM and gather
    # pages with manual pltpu.make_async_copy instead of holding it resident in VMEM.

    # Pad the tiny int32 index array (NOT a gathered slab) so batch tiles are
    # (8,128)-friendly; index 0 is always valid and padded rows are sliced off.
    B_pad = _round_up(B, 128)
    if B_pad != B:
        X = jnp.pad(X, ((0, B_pad - B), (0, 0)))

    TB = batch_tile if batch_tile is not None else _pick_batch_tile(B_pad)

    y = pl.pallas_call(
        functools.partial(_fm_kernel, num_fields=num_fields, emb_dim=emb_dim),
        out_shape=jax.ShapeDtypeStruct((B_pad, 1), jnp.float32),
        grid=(B_pad // TB,),
        in_specs=[
            pl.BlockSpec(memory_space=pltpu.SMEM),               # bias scalar
            pl.BlockSpec((V_pad, D_aug), lambda i: (0, 0)),      # table hi (fetched once)
            pl.BlockSpec((V_pad, D_aug), lambda i: (0, 0)),      # table lo (fetched once)
            pl.BlockSpec((TB, F), lambda i: (i, 0)),             # index tile
        ],
        out_specs=pl.BlockSpec((TB, 1), lambda i: (i, 0)),
        compiler_params=pltpu.CompilerParams(
            dimension_semantics=("parallel",)),
    )(bias, aug_hi, aug_lo, X)

    return y[:B]


def fm_forward(X, y, params):
    """Full FM forward. The embedding + linear gathers are fused into the kernel
    (count matmul against a small VMEM-resident table), so the only per-example HBM
    traffic is the (B, F) int32 indices and the (B, 1) output."""
    emb = params["embedding"].astype(jnp.float32)          # (vocab, D)
    lin = params["linear_weight"].astype(jnp.float32)      # (vocab,)
    bias = params["bias"].astype(jnp.float32)              # (1,)

    vocab, D = emb.shape
    B, F = X.shape
    V_pad = _round_up(vocab, 128)
    D_aug = _round_up(D + 2, 128)

    # Augmented table: [emb | rowsum(emb^2) | linear_w | 0-pad], split into bf16
    # hi + residual halves so the in-kernel bf16 MXU matmuls keep f32-table numerics.
    aug = jnp.zeros((V_pad, D_aug), jnp.float32)
    aug = aug.at[:vocab, :D].set(emb)
    aug = aug.at[:vocab, D].set(jnp.sum(emb * emb, axis=-1))
    aug = aug.at[:vocab, D + 1].set(lin)
    aug_hi = aug.astype(jnp.bfloat16)
    aug_lo = (aug - aug_hi.astype(jnp.float32)).astype(jnp.bfloat16)

    y_pred = fm_pallas(X.astype(jnp.int32), aug_hi, aug_lo, bias, F, D)   # (B, 1)
    y_true = y.reshape(y_pred.shape)
    return {"y_true": y_true, "y_pred": y_pred}


def _fm_reference(X, y, params):
    """Pure-JAX f32 reference with exact gathers (matches the PyTorch f32 FM math)."""
    emb_table = params["embedding"].astype(jnp.float32)
    lin_table = params["linear_weight"].astype(jnp.float32)
    bias = params["bias"].astype(jnp.float32)
    X_emb = jnp.take(emb_table, X, axis=0)                   # (B, F, D)
    lin = jnp.take(lin_table, X, axis=0)                     # (B, F)
    linear = jnp.sum(lin, axis=-1, keepdims=True) + bias[0]
    sum_f = jnp.sum(X_emb, axis=1)
    sum_f_sq = jnp.sum(X_emb * X_emb, axis=1)
    inter = 0.5 * jnp.sum(sum_f * sum_f - sum_f_sq, axis=-1, keepdims=True)
    y_pred = jax.nn.sigmoid(linear + inter)
    return {"y_true": y.reshape(y_pred.shape), "y_pred": y_pred}


if __name__ == "__main__":
    # Synthetic "featuremap": 8 categorical fields, 10 values each -> vocab of 80.
    num_fields = 8
    vocab_per_field = 10
    vocab = num_fields * vocab_per_field
    emb_dim = 16
    batch = 250          # deliberately not a multiple of 128: exercises index-side padding

    key = jax.random.PRNGKey(0)
    k_emb, k_lin, k_x, k_y = jax.random.split(key, 4)

    params = {
        "embedding": jax.random.normal(k_emb, (vocab, emb_dim), jnp.float32) * 0.1,
        "linear_weight": jax.random.normal(k_lin, (vocab,), jnp.float32) * 0.1,
        "bias": jnp.zeros((1,), jnp.float32),
    }

    # Each field indexes into its own slice of the global vocab.
    field_offsets = jnp.arange(num_fields, dtype=jnp.int32) * vocab_per_field
    X = (jax.random.randint(k_x, (batch, num_fields), 0, vocab_per_field,
                            dtype=jnp.int32) + field_offsets[None, :])
    y = jax.random.bernoulli(k_y, 0.5, (batch,)).astype(jnp.float32)

    out = jax.jit(fm_forward)(X, y, params)
    jax.block_until_ready(out)

    ref = _fm_reference(X, y, params)       # exact-gather f32 reference
    assert out["y_pred"].shape == (batch, 1)
    assert out["y_true"].shape == (batch, 1)
    max_err = float(jnp.max(jnp.abs(out["y_pred"] - ref["y_pred"])))
    assert max_err < 2e-5, max_err
    assert jnp.allclose(out["y_true"], ref["y_true"])

    print("KERNEL_OK")
</pallas_src>

<mosaic_0001>
module attributes {stable_mosaic.version = 11 : i64} {
  func.func @_fm_kernel(%arg0: i32, %arg1: memref<1xf32, #tpu.memory_space<smem>>, %arg2: memref<128x128xbf16, #tpu.memory_space<vmem>>, %arg3: memref<128x128xbf16, #tpu.memory_space<vmem>>, %arg4: memref<128x8xi32, #tpu.memory_space<vmem>>, %arg5: memref<128x1xf32, #tpu.memory_space<vmem>>) attributes {dimension_semantics = [#tpu.dimension_semantics<parallel>], iteration_bounds = array<i64: 2>, scalar_prefetch = 0 : i64, scratch_operands = 0 : i64, tpu.core_type = #tpu.core_type<tc>, window_params = [{transform_indices = @transform_0, window_bounds = array<i64: 1>}, {pipeline_mode = #tpu.pipeline_mode<synchronous>, transform_indices = @transform_1, window_bounds = array<i64: 128, 128>}, {pipeline_mode = #tpu.pipeline_mode<synchronous>, transform_indices = @transform_2, window_bounds = array<i64: 128, 128>}, {transform_indices = @transform_3, window_bounds = array<i64: 128, 8>}, {transform_indices = @transform_4, window_bounds = array<i64: 128, 1>}]} {
    %c0 = arith.constant 0 : index
    %c0_0 = arith.constant 0 : index
    %0 = vector.load %arg4[%c0, %c0_0] : memref<128x8xi32, #tpu.memory_space<vmem>>, vector<128x8xi32>
    %1 = tpu.iota {dimensions = array<i32: 1>} : vector<128x128xi32>
    %cst = arith.constant 0.000000e+00 : f32
    %2 = vector.broadcast %cst : f32 to vector<128x128xf32>
    %3 = vector.extract_strided_slice %0 {offsets = [0, 0], sizes = [128, 1], strides = [1, 1]} : vector<128x8xi32> to vector<128x1xi32>
    %4 = vector.broadcast %3 : vector<128x1xi32> to vector<128x128xi32>
    %5 = arith.cmpi eq, %4, %1 : vector<128x128xi32>
    %cst_1 = arith.constant 1.000000e+00 : f32
    %cst_2 = arith.constant 0.000000e+00 : f32
    %6 = vector.broadcast %cst_1 : f32 to vector<128x128xf32>
    %7 = vector.broadcast %cst_2 : f32 to vector<128x128xf32>
    %8 = arith.select %5, %6, %7 : vector<128x128xi1>, vector<128x128xf32>
    %9 = arith.addf %2, %8 : vector<128x128xf32>
    %10 = vector.extract_strided_slice %0 {offsets = [0, 1], sizes = [128, 1], strides = [1, 1]} : vector<128x8xi32> to vector<128x1xi32>
    %11 = vector.broadcast %10 : vector<128x1xi32> to vector<128x128xi32>
    %12 = arith.cmpi eq, %11, %1 : vector<128x128xi32>
    %cst_3 = arith.constant 1.000000e+00 : f32
    %cst_4 = arith.constant 0.000000e+00 : f32
    %13 = vector.broadcast %cst_3 : f32 to vector<128x128xf32>
    %14 = vector.broadcast %cst_4 : f32 to vector<128x128xf32>
    %15 = arith.select %12, %13, %14 : vector<128x128xi1>, vector<128x128xf32>
    %16 = arith.addf %9, %15 : vector<128x128xf32>
    %17 = vector.extract_strided_slice %0 {offsets = [0, 2], sizes = [128, 1], strides = [1, 1]} : vector<128x8xi32> to vector<128x1xi32>
    %18 = vector.broadcast %17 : vector<128x1xi32> to vector<128x128xi32>
    %19 = arith.cmpi eq, %18, %1 : vector<128x128xi32>
    %cst_5 = arith.constant 1.000000e+00 : f32
    %cst_6 = arith.constant 0.000000e+00 : f32
    %20 = vector.broadcast %cst_5 : f32 to vector<128x128xf32>
    %21 = vector.broadcast %cst_6 : f32 to vector<128x128xf32>
    %22 = arith.select %19, %20, %21 : vector<128x128xi1>, vector<128x128xf32>
    %23 = arith.addf %16, %22 : vector<128x128xf32>
    %24 = vector.extract_strided_slice %0 {offsets = [0, 3], sizes = [128, 1], strides = [1, 1]} : vector<128x8xi32> to vector<128x1xi32>
    %25 = vector.broadcast %24 : vector<128x1xi32> to vector<128x128xi32>
    %26 = arith.cmpi eq, %25, %1 : vector<128x128xi32>
    %cst_7 = arith.constant 1.000000e+00 : f32
    %cst_8 = arith.constant 0.000000e+00 : f32
    %27 = vector.broadcast %cst_7 : f32 to vector<128x128xf32>
    %28 = vector.broadcast %cst_8 : f32 to vector<128x128xf32>
    %29 = arith.select %26, %27, %28 : vector<128x128xi1>, vector<128x128xf32>
    %30 = arith.addf %23, %29 : vector<128x128xf32>
    %31 = vector.extract_strided_slice %0 {offsets = [0, 4], sizes = [128, 1], strides = [1, 1]} : vector<128x8xi32> to vector<128x1xi32>
    %32 = vector.broadcast %31 : vector<128x1xi32> to vector<128x128xi32>
    %33 = arith.cmpi eq, %32, %1 : vector<128x128xi32>
    %cst_9 = arith.constant 1.000000e+00 : f32
    %cst_10 = arith.constant 0.000000e+00 : f32
    %34 = vector.broadcast %cst_9 : f32 to vector<128x128xf32>
    %35 = vector.broadcast %cst_10 : f32 to vector<128x128xf32>
    %36 = arith.select %33, %34, %35 : vector<128x128xi1>, vector<128x128xf32>
    %37 = arith.addf %30, %36 : vector<128x128xf32>
    %38 = vector.extract_strided_slice %0 {offsets = [0, 5], sizes = [128, 1], strides = [1, 1]} : vector<128x8xi32> to vector<128x1xi32>
    %39 = vector.broadcast %38 : vector<128x1xi32> to vector<128x128xi32>
    %40 = arith.cmpi eq, %39, %1 : vector<128x128xi32>
    %cst_11 = arith.constant 1.000000e+00 : f32
    %cst_12 = arith.constant 0.000000e+00 : f32
    %41 = vector.broadcast %cst_11 : f32 to vector<128x128xf32>
    %42 = vector.broadcast %cst_12 : f32 to vector<128x128xf32>
    %43 = arith.select %40, %41, %42 : vector<128x128xi1>, vector<128x128xf32>
    %44 = arith.addf %37, %43 : vector<128x128xf32>
    %45 = vector.extract_strided_slice %0 {offsets = [0, 6], sizes = [128, 1], strides = [1, 1]} : vector<128x8xi32> to vector<128x1xi32>
    %46 = vector.broadcast %45 : vector<128x1xi32> to vector<128x128xi32>
    %47 = arith.cmpi eq, %46, %1 : vector<128x128xi32>
    %cst_13 = arith.constant 1.000000e+00 : f32
    %cst_14 = arith.constant 0.000000e+00 : f32
    %48 = vector.broadcast %cst_13 : f32 to vector<128x128xf32>
    %49 = vector.broadcast %cst_14 : f32 to vector<128x128xf32>
    %50 = arith.select %47, %48, %49 : vector<128x128xi1>, vector<128x128xf32>
    %51 = arith.addf %44, %50 : vector<128x128xf32>
    %52 = vector.extract_strided_slice %0 {offsets = [0, 7], sizes = [128, 1], strides = [1, 1]} : vector<128x8xi32> to vector<128x1xi32>
    %53 = vector.broadcast %52 : vector<128x1xi32> to vector<128x128xi32>
    %54 = arith.cmpi eq, %53, %1 : vector<128x128xi32>
    %cst_15 = arith.constant 1.000000e+00 : f32
    %cst_16 = arith.constant 0.000000e+00 : f32
    %55 = vector.broadcast %cst_15 : f32 to vector<128x128xf32>
    %56 = vector.broadcast %cst_16 : f32 to vector<128x128xf32>
    %57 = arith.select %54, %55, %56 : vector<128x128xi1>, vector<128x128xf32>
    %58 = arith.addf %51, %57 : vector<128x128xf32>
    %59 = arith.truncf %58 : vector<128x128xf32> to vector<128x128xbf16>
    %c0_17 = arith.constant 0 : index
    %c0_18 = arith.constant 0 : index
    %60 = vector.load %arg2[%c0_17, %c0_18] : memref<128x128xbf16, #tpu.memory_space<vmem>>, vector<128x128xbf16>
    %cst_19 = arith.constant dense<0.000000e+00> : vector<128x128xf32>
    %61 = tpu.matmul %59, %60, %cst_19 {dimension_numbers = #tpu.dot_dimension_numbers<[1], [0], [0], [1], [0, 0, 1, 1], [], []>} : vector<128x128xbf16>, vector<128x128xbf16>, vector<128x128xf32> -> vector<128x128xf32>
    %c0_20 = arith.constant 0 : index
    %c0_21 = arith.constant 0 : index
    %62 = vector.load %arg3[%c0_20, %c0_21] : memref<128x128xbf16, #tpu.memory_space<vmem>>, vector<128x128xbf16>
    %cst_22 = arith.constant dense<0.000000e+00> : vector<128x128xf32>
    %63 = tpu.matmul %59, %62, %cst_22 {dimension_numbers = #tpu.dot_dimension_numbers<[1], [0], [0], [1], [0, 0, 1, 1], [], []>} : vector<128x128xbf16>, vector<128x128xbf16>, vector<128x128xf32> -> vector<128x128xf32>
    %64 = arith.addf %61, %63 : vector<128x128xf32>
    %65 = vector.extract_strided_slice %64 {offsets = [0, 0], sizes = [128, 16], strides = [1, 1]} : vector<128x128xf32> to vector<128x16xf32>
    %66 = vector.extract_strided_slice %64 {offsets = [0, 16], sizes = [128, 1], strides = [1, 1]} : vector<128x128xf32> to vector<128x1xf32>
    %67 = vector.extract_strided_slice %64 {offsets = [0, 17], sizes = [128, 1], strides = [1, 1]} : vector<128x128xf32> to vector<128x1xf32>
    %68 = arith.mulf %65, %65 : vector<128x16xf32>
    %cst_23 = arith.constant dense<0.000000e+00> : vector<128xf32>
    %69 = vector.multi_reduction <add>, %68, %cst_23 [1] : vector<128x16xf32> to vector<128xf32>
    %70 = vector.shape_cast %69 : vector<128xf32> to vector<128x1xf32>
    %71 = arith.subf %70, %66 : vector<128x1xf32>
    %cst_24 = arith.constant 5.000000e-01 : f32
    %72 = vector.broadcast %cst_24 : f32 to vector<128x1xf32>
    %73 = arith.mulf %72, %71 : vector<128x1xf32>
    %c0_25 = arith.constant 0 : index
    %74 = memref.load %arg1[%c0_25] : memref<1xf32, #tpu.memory_space<smem>>
    %75 = vector.broadcast %74 : f32 to vector<128x1xf32>
    %76 = arith.addf %67, %75 : vector<128x1xf32>
    %77 = arith.addf %76, %73 : vector<128x1xf32>
    %78 = arith.negf %77 : vector<128x1xf32>
    %79 = math.exp %78 : vector<128x1xf32>
    %cst_26 = arith.constant 1.000000e+00 : f32
    %80 = vector.broadcast %cst_26 : f32 to vector<128x1xf32>
    %81 = arith.addf %80, %79 : vector<128x1xf32>
    %82 = arith.divf %80, %81 : vector<128x1xf32>
    %c0_27 = arith.constant 0 : index
    %c0_28 = arith.constant 0 : index
    %83 = vector.load %arg5[%c0_27, %c0_28] : memref<128x1xf32, #tpu.memory_space<vmem>>, vector<128x1xf32>
    tpu.vector_store %arg5[%c0_27, %c0_28], %82 {strides = array<i32>} : memref<128x1xf32, #tpu.memory_space<vmem>>, vector<128x1xf32>,
    return
  }
  func.func @transform_0(%arg0: i32) -> i32 {
    %c0_i32 = arith.constant 0 : i32
    %c0_i32_0 = arith.constant 0 : i32
    return %c0_i32 : i32
  }
  func.func @transform_1(%arg0: i32) -> (i32, i32) {
    %c0_i32 = arith.constant 0 : i32
    %c0_i32_0 = arith.constant 0 : i32
    %c0_i32_1 = arith.constant 0 : i32
    return %c0_i32, %c0_i32_0 : i32, i32
  }
  func.func @transform_2(%arg0: i32) -> (i32, i32) {
    %c0_i32 = arith.constant 0 : i32
    %c0_i32_0 = arith.constant 0 : i32
    %c0_i32_1 = arith.constant 0 : i32
    return %c0_i32, %c0_i32_0 : i32, i32
  }
  func.func @transform_3(%arg0: i32) -> (i32, i32) {
    %c0_i32 = arith.constant 0 : i32
    %c0_i32_0 = arith.constant 0 : i32
    return %arg0, %c0_i32 : i32, i32
  }
  func.func @transform_4(%arg0: i32) -> (i32, i32) {
    %c0_i32 = arith.constant 0 : i32
    %c0_i32_0 = arith.constant 0 : i32
    return %arg0, %c0_i32 : i32, i32
  }
}

</mosaic_0001>

<llo_original>
// kernel: fm_forward.1
$region0: #{fm_forward.1}
  #allocation0 [shape = 'u32[]', space=smem, size = 0x4, offset = 0x4, fixed_abs, tag = 'smem constant byte address 0x4 - core index']
  #allocation1 [shape = 'u32[144,128]{1,0:T(1,128)}', space=vmem, size = 0x12000, scoped, tag = 'internal scratch']
  #allocation2 [shape = 'f32[1]{0:T(128)S(6)}', space=smem, size = 0x200, scoped, tag = 'scoped memory for fm_forward.1']
  %s0 = inlined_call_operand.<no memory space> [shape: f32[1], index: 0, kind: input, shape index: {}]
  %s1 = inlined_call_operand.vmem [shape: bf16[128,128], index: 1, kind: input, shape index: {}]
  %s2 = inlined_call_operand.vmem [shape: bf16[128,128], index: 2, kind: input, shape index: {}]
  %s3 = inlined_call_operand.vmem [shape: s32[256,8], index: 3, kind: input, shape index: {}]
  %s4 = inlined_call_operand.vmem [shape: f32[256,1], index: 4, kind: output, shape index: {}]
  %s5 = sld [smem:[#allocation0]]
  $region49: #{fm_forward.1} parent=0
    _
  %s7 = ssub.s32 1, %s5
  %s8 = scalar_select 0, %s7, %s5
  %9 = sst [smem:[#allocation2]] %s0
  loop: start=0, step=1, limit=4
  $region2: #{fm_forward.1} parent=0 // loop_pre_header
    _
  $region3: #{fm_forward.1} parent=0 // loop_header
    %s11 = sphi 0, %s15
    %p12 = scmp.ge.s32.totalorder %s11, 4
    %s19 = sphi 0, %s19
    %s21 = sphi 0, %s19
    %s22 = sphi 0, %s21
    %s36 = sphi 0, %s22
    %s40 = sphi 0, %s40
    %s42 = sphi 0, %s40
    %s43 = sphi 0, %s42
    %s57 = sphi 0, %s43
    %s61 = sphi 0, %s61
    %s63 = sphi 0, %s61
    %s64 = sphi 0, %s63
    %s78 = sphi 0, %s64
    %s84 = sphi 0, %s86
    %s87 = sphi 0, %s84
    %s88 = sphi 0, %s87
    %s104 = sphi 0, %s88
    %s110 = sphi 0, %s112
    %s113 = sphi 0, %s110
    %s114 = sphi 0, %s113
    %s130 = sphi 0, %s114
  $region4: #{fm_forward.1} parent=0 // loop_header_branch
    %14 = sbr.rel (%p12) target = $region8
  $region5: #{fm_forward.1} parent=0 // loop_body
    %s16 = ssub.s32 %s11, 1
    %s17 = ssub.s32 %s11, 2
    %s18 = sadd.s32 %s11, 1
    %s20 = sadd.s32 %s19, 1
    %p23 = scmp.eq.s32.totalorder %s11, 1
    %p24 = scmp.ne.s32.totalorder %s19, %s21
    %p25 = scmp.eq.s32.totalorder %s11, 0
    %p26 = por %p24, %p25
    %p27 = scmp.ne.s32.totalorder %s19, %s21
    %p28 = scmp.eq.s32.totalorder %s16, 1
    %p29 = por %p27, %p28
    %p30 = scmp.ne.s32.totalorder %s21, %s22
    %p31 = scmp.eq.s32.totalorder %s16, 0
    %p32 = por %p30, %p31
    %p33 = scmp.ne.s32.totalorder %s21, %s22
    %p34 = scmp.eq.s32.totalorder %s17, 1
    %p35 = por %p33, %p34
    %p37 = scmp.ne.s32.totalorder %s22, %s36
    %p38 = scmp.eq.s32.totalorder %s17, 0
    %p39 = por %p37, %p38
    %s41 = sadd.s32 %s40, 1
    %p44 = scmp.eq.s32.totalorder %s11, 1
    %p45 = scmp.ne.s32.totalorder %s40, %s42
    %p46 = scmp.eq.s32.totalorder %s11, 0
    %p47 = por %p45, %p46
    %p48 = scmp.ne.s32.totalorder %s40, %s42
    %p49 = scmp.eq.s32.totalorder %s16, 1
    %p50 = por %p48, %p49
    %p51 = scmp.ne.s32.totalorder %s42, %s43
    %p52 = scmp.eq.s32.totalorder %s16, 0
    %p53 = por %p51, %p52
    %p54 = scmp.ne.s32.totalorder %s42, %s43
    %p55 = scmp.eq.s32.totalorder %s17, 1
    %p56 = por %p54, %p55
    %p58 = scmp.ne.s32.totalorder %s43, %s57
    %p59 = scmp.eq.s32.totalorder %s17, 0
    %p60 = por %p58, %p59
    %s62 = sadd.s32 %s61, 1
    %p65 = scmp.eq.s32.totalorder %s11, 1
    %p66 = scmp.ne.s32.totalorder %s61, %s63
    %p67 = scmp.eq.s32.totalorder %s11, 0
    %p68 = por %p66, %p67
    %p69 = scmp.ne.s32.totalorder %s61, %s63
    %p70 = scmp.eq.s32.totalorder %s16, 1
    %p71 = por %p69, %p70
    %p72 = scmp.ne.s32.totalorder %s63, %s64
    %p73 = scmp.eq.s32.totalorder %s16, 0
    %p74 = por %p72, %p73
    %p75 = scmp.ne.s32.totalorder %s63, %s64
    %p76 = scmp.eq.s32.totalorder %s17, 1
    %p77 = por %p75, %p76
    %p79 = scmp.ne.s32.totalorder %s64, %s78
    %p80 = scmp.eq.s32.totalorder %s17, 0
    %p81 = por %p79, %p80
    %s82 = ssub.s32 %s11, %s18
    %p83 = scmp.eq.s32.totalorder %s82, 0
    %s85 = sadd.s32 %s84, 1
    %s86 = scalar_select %p83, %s84, %s85
    %p89 = pneg %p83
    %p90 = scmp.eq.s32.totalorder %s11, 1
    %p91 = por %p89, %p90
    %p92 = scmp.ne.s32.totalorder %s84, %s87
    %p93 = scmp.eq.s32.totalorder %s11, 0
    %p94 = por %p92, %p93
    %p95 = scmp.ne.s32.totalorder %s84, %s87
    %p96 = scmp.eq.s32.totalorder %s16, 1
    %p97 = por %p95, %p96
    %p98 = scmp.ne.s32.totalorder %s87, %s88
    %p99 = scmp.eq.s32.totalorder %s16, 0
    %p100 = por %p98, %p99
    %p101 = scmp.ne.s32.totalorder %s87, %s88
    %p102 = scmp.eq.s32.totalorder %s17, 1
    %p103 = por %p101, %p102
    %p105 = scmp.ne.s32.totalorder %s88, %s104
    %p106 = scmp.eq.s32.totalorder %s17, 0
    %p107 = por %p105, %p106
    %s108 = ssub.s32 %s11, %s18
    %p109 = scmp.eq.s32.totalorder %s108, 0
    %s111 = sadd.s32 %s110, 1
    %s112 = scalar_select %p109, %s110, %s111
    %p115 = pneg %p109
    %p116 = scmp.eq.s32.totalorder %s11, 1
    %p117 = por %p115, %p116
    %p118 = scmp.ne.s32.totalorder %s110, %s113
    %p119 = scmp.eq.s32.totalorder %s11, 0
    %p120 = por %p118, %p119
    %p121 = scmp.ne.s32.totalorder %s110, %s113
    %p122 = scmp.eq.s32.totalorder %s16, 1
    %p123 = por %p121, %p122
    %p124 = scmp.ne.s32.totalorder %s113, %s114
    %p125 = scmp.eq.s32.totalorder %s16, 0
    %p126 = por %p124, %p125
    %p127 = scmp.ne.s32.totalorder %s113, %s114
    %p128 = scmp.eq.s32.totalorder %s17, 1
    %p129 = por %p127, %p128
    %p131 = scmp.ne.s32.totalorder %s114, %s130
    %p132 = scmp.eq.s32.totalorder %s17, 0
    %p133 = por %p131, %p132
    %p134 = scmp.le.s32.totalorder 1, %s11
    %p135 = scmp.lt.s32.totalorder %s11, 3
    %p136 = pnand %p134, %p135
    %p137 = pneg %p136
    // Predicated region
    $region9: #{fm_forward.1} parent=5 // pred_check
      _
    $region10: #{fm_forward.1} parent=5 // pred_check_branch
      %139 = sbr.rel (%p136) target = $region12
    $region11: #{fm_forward.1} parent=5 // pred_region
      %s140 = ssub.s32 %s11, 1
      // Predicated region
      $region13: #{fm_forward.1} parent=11 // pred_check
        %p141 = pneg %p32
      $region14: #{fm_forward.1} parent=11 // pred_check_branch
        %143 = sbr.rel (%p141) target = $region16
      $region15: #{fm_forward.1} parent=11 // pred_region
        _
      $region16: #{fm_forward.1} parent=11 // pred_fallthru
        _
      // Predicated region
      $region17: #{fm_forward.1} parent=11 // pred_check
        %p144 = pneg %p53
      $region18: #{fm_forward.1} parent=11 // pred_check_branch
        %146 = sbr.rel (%p144) target = $region20
      $region19: #{fm_forward.1} parent=11 // pred_region
        _
      $region20: #{fm_forward.1} parent=11 // pred_fallthru
        _
      // Predicated region
      $region21: #{fm_forward.1} parent=11 // pred_check
        %p147 = pneg %p74
      $region22: #{fm_forward.1} parent=11 // pred_check_branch
        %149 = sbr.rel (%p147) target = $region24
      $region23: #{fm_forward.1} parent=11 // pred_region
        _
      $region24: #{fm_forward.1} parent=11 // pred_fallthru
        _
    $region12: #{fm_forward.1} parent=5 // pred_fallthru
      _
    %p150 = scmp.lt.s32.totalorder %s11, 2
    // Predicated region
    $region25: #{fm_forward.1} parent=5 // pred_check
      %p151 = pneg %p150
    $region26: #{fm_forward.1} parent=5 // pred_check_branch
      %153 = sbr.rel (%p151) target = $region28
    $region27: #{fm_forward.1} parent=5 // pred_region
      // Predicated region
      $region29: #{fm_forward.1} parent=27 // pred_check
        %p154 = pneg %p94
      $region30: #{fm_forward.1} parent=27 // pred_check_branch
        %156 = sbr.rel (%p154) target = $region32
      $region31: #{fm_forward.1} parent=27 // pred_region
        %s157 = smul.u32 16, %s11
        %p158 = scmp.lt.s32.totalorder %s157, 31
        %s159 = scalar_select %p158, %s157, 31
        %s160 = smul.addr %s159, 8
        %s161 = scalar_lea.vmem %s3, %s160
        %s162 = smul.u32 16, %s11
      $region32: #{fm_forward.1} parent=27 // pred_fallthru
        _
    $region28: #{fm_forward.1} parent=5 // pred_fallthru
      _
    %p163 = scmp.le.s32.totalorder 1, %s11
    %p164 = scmp.lt.s32.totalorder %s11, 3
    %p165 = pnand %p163, %p164
    %p166 = pneg %p165
    // Predicated region
    $region33: #{fm_forward.1} parent=5 // pred_check
      _
    $region34: #{fm_forward.1} parent=5 // pred_check_branch
      %168 = sbr.rel (%p165) target = $region36
    $region35: #{fm_forward.1} parent=5 // pred_region
      %s169 = ssub.s32 %s11, 1
      %p170 = pneg %p32
      %p171 = pneg %p29
      %p172 = pneg %p53
      %p173 = pneg %p50
      %p174 = pneg %p74
      %p175 = pneg %p71
      %s176 = smul.u32 16, %s16
      %p177 = scmp.lt.s32.totalorder %s176, 31
      %s178 = scalar_select %p177, %s176, 31
      %s179 = smul.addr %s178, 8
      %s180 = scalar_lea.vmem %s3, %s179
      %p181 = pneg %p100
      %p182 = pneg %p97
      %p183 = pneg %p126
      %p184 = pneg %p123
      %s185 = smul.u32 16, %s16
      %p186 = scmp.lt.s32.totalorder %s185, 31
      %s187 = scalar_select %p186, %s185, 31
      %s188 = smul.addr %s187, 8
      %s189 = scalar_lea.vmem %s4, %s188
      %s190 = smul.u32 16, %s16
      %p191 = scmp.lt.s32.totalorder %s190, 31
      %s192 = scalar_select %p191, %s190, 31
      %s193 = smul.addr %s192, 8
      %s194 = scalar_lea.vmem %s3, %s193
      %s195 = smul.u32 16, %s16
      %s196 = smul.u32 16, %s16
      %p197 = scmp.lt.s32.totalorder %s196, 31
      %s198 = scalar_select %p197, %s196, 31
      %s199 = smul.addr %s198, 8
      %s200 = scalar_lea.vmem %s4, %s199
      %s201 = smul.u32 16, %s16
      %v203 = vld [vmem:[%s194] sm:$0xff]
      %v204 = vld [vmem:[%s194 + $0x8] sm:$0xff]
      %v205 = vld [vmem:[%s194 + $0x10] sm:$0xff]
      %v206 = vld [vmem:[%s194 + $0x18] sm:$0xff]
      %v207 = vld [vmem:[%s194 + $0x20] sm:$0xff]
      %v208 = vld [vmem:[%s194 + $0x28] sm:$0xff]
      %v209 = vld [vmem:[%s194 + $0x30] sm:$0xff]
      %v210 = vld [vmem:[%s194 + $0x38] sm:$0xff]
      %v211 = vld [vmem:[%s194 + $0x40] sm:$0xff]
      %v212 = vld [vmem:[%s194 + $0x48] sm:$0xff]
      %v213 = vld [vmem:[%s194 + $0x50] sm:$0xff]
      %v214 = vld [vmem:[%s194 + $0x58] sm:$0xff]
      %v215 = vld [vmem:[%s194 + $0x60] sm:$0xff]
      %v216 = vld [vmem:[%s194 + $0x68] sm:$0xff]
      %v217 = vld [vmem:[%s194 + $0x70] sm:$0xff]
      %v218 = vld [vmem:[%s194 + $0x78] sm:$0xff]
      %v219 = vlaneseq
      %v220 = vand.u32 %v219, 127
      %221 = vset.pattern.permute.xlu0 0
      %222 = vperm.xlu0 %221, %v203
      %v223 = vpop.permute.xlu0 %222
      %224 = vset.pattern.permute.xlu0 0
      %225 = vperm.xlu0 %224, %v204
      %v226 = vpop.permute.xlu0 %225
      %227 = vset.pattern.permute.xlu0 0
      %228 = vperm.xlu0 %227, %v205
      %v229 = vpop.permute.xlu0 %228
      %230 = vset.pattern.permute.xlu0 0
      %231 = vperm.xlu0 %230, %v206
      %v232 = vpop.permute.xlu0 %231
      %233 = vset.pattern.permute.xlu0 0
      %234 = vperm.xlu0 %233, %v207
      %v235 = vpop.permute.xlu0 %234
      %236 = vset.pattern.permute.xlu0 0
      %237 = vperm.xlu0 %236, %v208
      %v238 = vpop.permute.xlu0 %237
      %239 = vset.pattern.permute.xlu0 0
      %240 = vperm.xlu0 %239, %v209
      %v241 = vpop.permute.xlu0 %240
      %242 = vset.pattern.permute.xlu0 0
      %243 = vperm.xlu0 %242, %v210
      %v244 = vpop.permute.xlu0 %243
      %245 = vset.pattern.permute.xlu0 0
      %246 = vperm.xlu0 %245, %v211
      %v247 = vpop.permute.xlu0 %246
      %248 = vset.pattern.permute.xlu0 0
      %249 = vperm.xlu0 %248, %v212
      %v250 = vpop.permute.xlu0 %249
      %251 = vset.pattern.permute.xlu0 0
      %252 = vperm.xlu0 %251, %v213
      %v253 = vpop.permute.xlu0 %252
      %254 = vset.pattern.permute.xlu0 0
      %255 = vperm.xlu0 %254, %v214
      %v256 = vpop.permute.xlu0 %255
      %257 = vset.pattern.permute.xlu0 0
      %258 = vperm.xlu0 %257, %v215
      %v259 = vpop.permute.xlu0 %258
      %260 = vset.pattern.permute.xlu0 0
      %261 = vperm.xlu0 %260, %v216
      %v262 = vpop.permute.xlu0 %261
      %263 = vset.pattern.permute.xlu0 0
      %264 = vperm.xlu0 %263, %v217
      %v265 = vpop.permute.xlu0 %264
      %266 = vset.pattern.permute.xlu0 0
      %267 = vperm.xlu0 %266, %v218
      %v268 = vpop.permute.xlu0 %267
      %vm269 = vcmp.eq.s32.totalorder %v223, %v220
      %vm270 = vcmp.eq.s32.totalorder %v226, %v220
      %vm271 = vcmp.eq.s32.totalorder %v229, %v220
      %vm272 = vcmp.eq.s32.totalorder %v232, %v220
      %vm273 = vcmp.eq.s32.totalorder %v235, %v220
      %vm274 = vcmp.eq.s32.totalorder %v238, %v220
      %vm275 = vcmp.eq.s32.totalorder %v241, %v220
      %vm276 = vcmp.eq.s32.totalorder %v244, %v220
      %vm277 = vcmp.eq.s32.totalorder %v247, %v220
      %vm278 = vcmp.eq.s32.totalorder %v250, %v220
      %vm279 = vcmp.eq.s32.totalorder %v253, %v220
      %vm280 = vcmp.eq.s32.totalorder %v256, %v220
      %vm281 = vcmp.eq.s32.totalorder %v259, %v220
      %vm282 = vcmp.eq.s32.totalorder %v262, %v220
      %vm283 = vcmp.eq.s32.totalorder %v265, %v220
      %vm284 = vcmp.eq.s32.totalorder %v268, %v220
      %v285 = vsel %vm269, 1.0, 0.0
      %v286 = vsel %vm270, 1.0, 0.0
      %v287 = vsel %vm271, 1.0, 0.0
      %v288 = vsel %vm272, 1.0, 0.0
      %v289 = vsel %vm273, 1.0, 0.0
      %v290 = vsel %vm274, 1.0, 0.0
      %v291 = vsel %vm275, 1.0, 0.0
      %v292 = vsel %vm276, 1.0, 0.0
      %v293 = vsel %vm277, 1.0, 0.0
      %v294 = vsel %vm278, 1.0, 0.0
      %v295 = vsel %vm279, 1.0, 0.0
      %v296 = vsel %vm280, 1.0, 0.0
      %v297 = vsel %vm281, 1.0, 0.0
      %v298 = vsel %vm282, 1.0, 0.0
      %v299 = vsel %vm283, 1.0, 0.0
      %v300 = vsel %vm284, 1.0, 0.0
      %v301 = vadd.f32 %v285, 0.0
      %v302 = vadd.f32 %v286, 0.0
      %v303 = vadd.f32 %v287, 0.0
      %v304 = vadd.f32 %v288, 0.0
      %v305 = vadd.f32 %v289, 0.0
      %v306 = vadd.f32 %v290, 0.0
      %v307 = vadd.f32 %v291, 0.0
      %v308 = vadd.f32 %v292, 0.0
      %v309 = vadd.f32 %v293, 0.0
      %v310 = vadd.f32 %v294, 0.0
      %v311 = vadd.f32 %v295, 0.0
      %v312 = vadd.f32 %v296, 0.0
      %v313 = vadd.f32 %v297, 0.0
      %v314 = vadd.f32 %v298, 0.0
      %v315 = vadd.f32 %v299, 0.0
      %v316 = vadd.f32 %v300, 0.0
      %317 = vset.pattern.permute.xlu0 1
      %318 = vperm.xlu0 %317, %v203
      %v319 = vpop.permute.xlu0 %318
      %320 = vset.pattern.permute.xlu0 1
      %321 = vperm.xlu0 %320, %v204
      %v322 = vpop.permute.xlu0 %321
      %323 = vset.pattern.permute.xlu0 1
      %324 = vperm.xlu0 %323, %v205
      %v325 = vpop.permute.xlu0 %324
      %326 = vset.pattern.permute.xlu0 1
      %327 = vperm.xlu0 %326, %v206
      %v328 = vpop.permute.xlu0 %327
      %329 = vset.pattern.permute.xlu0 1
      %330 = vperm.xlu0 %329, %v207
      %v331 = vpop.permute.xlu0 %330
      %332 = vset.pattern.permute.xlu0 1
      %333 = vperm.xlu0 %332, %v208
      %v334 = vpop.permute.xlu0 %333
      %335 = vset.pattern.permute.xlu0 1
      %336 = vperm.xlu0 %335, %v209
      %v337 = vpop.permute.xlu0 %336
      %338 = vset.pattern.permute.xlu0 1
      %339 = vperm.xlu0 %338, %v210
      %v340 = vpop.permute.xlu0 %339
      %341 = vset.pattern.permute.xlu0 1
      %342 = vperm.xlu0 %341, %v211
      %v343 = vpop.permute.xlu0 %342
      %344 = vset.pattern.permute.xlu0 1
      %345 = vperm.xlu0 %344, %v212
      %v346 = vpop.permute.xlu0 %345
      %347 = vset.pattern.permute.xlu0 1
      %348 = vperm.xlu0 %347, %v213
      %v349 = vpop.permute.xlu0 %348
      %350 = vset.pattern.permute.xlu0 1
      %351 = vperm.xlu0 %350, %v214
      %v352 = vpop.permute.xlu0 %351
      %353 = vset.pattern.permute.xlu0 1
      %354 = vperm.xlu0 %353, %v215
      %v355 = vpop.permute.xlu0 %354
      %356 = vset.pattern.permute.xlu0 1
      %357 = vperm.xlu0 %356, %v216
      %v358 = vpop.permute.xlu0 %357
      %359 = vset.pattern.permute.xlu0 1
      %360 = vperm.xlu0 %359, %v217
      %v361 = vpop.permute.xlu0 %360
      %362 = vset.pattern.permute.xlu0 1
      %363 = vperm.xlu0 %362, %v218
      %v364 = vpop.permute.xlu0 %363
      %vm365 = vcmp.eq.s32.totalorder %v319, %v220
      %vm366 = vcmp.eq.s32.totalorder %v322, %v220
      %vm367 = vcmp.eq.s32.totalorder %v325, %v220
      %vm368 = vcmp.eq.s32.totalorder %v328, %v220
      %vm369 = vcmp.eq.s32.totalorder %v331, %v220
      %vm370 = vcmp.eq.s32.totalorder %v334, %v220
      %vm371 = vcmp.eq.s32.totalorder %v337, %v220
      %vm372 = vcmp.eq.s32.totalorder %v340, %v220
      %vm373 = vcmp.eq.s32.totalorder %v343, %v220
      %vm374 = vcmp.eq.s32.totalorder %v346, %v220
      %vm375 = vcmp.eq.s32.totalorder %v349, %v220
      %vm376 = vcmp.eq.s32.totalorder %v352, %v220
      %vm377 = vcmp.eq.s32.totalorder %v355, %v220
      %vm378 = vcmp.eq.s32.totalorder %v358, %v220
      %vm379 = vcmp.eq.s32.totalorder %v361, %v220
      %vm380 = vcmp.eq.s32.totalorder %v364, %v220
      %v381 = vsel %vm365, 1.0, 0.0
      %v382 = vsel %vm366, 1.0, 0.0
      %v383 = vsel %vm367, 1.0, 0.0
      %v384 = vsel %vm368, 1.0, 0.0
      %v385 = vsel %vm369, 1.0, 0.0
      %v386 = vsel %vm370, 1.0, 0.0
      %v387 = vsel %vm371, 1.0, 0.0
      %v388 = vsel %vm372, 1.0, 0.0
      %v389 = vsel %vm373, 1.0, 0.0
      %v390 = vsel %vm374, 1.0, 0.0
      %v391 = vsel %vm375, 1.0, 0.0
      %v392 = vsel %vm376, 1.0, 0.0
      %v393 = vsel %vm377, 1.0, 0.0
      %v394 = vsel %vm378, 1.0, 0.0
      %v395 = vsel %vm379, 1.0, 0.0
      %v396 = vsel %vm380, 1.0, 0.0
      %v397 = vadd.f32 %v301, %v381
      %v398 = vadd.f32 %v302, %v382
      %v399 = vadd.f32 %v303, %v383
      %v400 = vadd.f32 %v304, %v384
      %v401 = vadd.f32 %v305, %v385
      %v402 = vadd.f32 %v306, %v386
      %v403 = vadd.f32 %v307, %v387
      %v404 = vadd.f32 %v308, %v388
      %v405 = vadd.f32 %v309, %v389
      %v406 = vadd.f32 %v310, %v390
      %v407 = vadd.f32 %v311, %v391
      %v408 = vadd.f32 %v312, %v392
      %v409 = vadd.f32 %v313, %v393
      %v410 = vadd.f32 %v314, %v394
      %v411 = vadd.f32 %v315, %v395
      %v412 = vadd.f32 %v316, %v396
      %413 = vset.pattern.permute.xlu0 2
      %414 = vperm.xlu0 %413, %v203
      %v415 = vpop.permute.xlu0 %414
      %416 = vset.pattern.permute.xlu0 2
      %417 = vperm.xlu0 %416, %v204
      %v418 = vpop.permute.xlu0 %417
      %419 = vset.pattern.permute.xlu0 2
      %420 = vperm.xlu0 %419, %v205
      %v421 = vpop.permute.xlu0 %420
      %422 = vset.pattern.permute.xlu0 2
      %423 = vperm.xlu0 %422, %v206
      %v424 = vpop.permute.xlu0 %423
      %425 = vset.pattern.permute.xlu0 2
      %426 = vperm.xlu0 %425, %v207
      %v427 = vpop.permute.xlu0 %426
      %428 = vset.pattern.permute.xlu0 2
      %429 = vperm.xlu0 %428, %v208
      %v430 = vpop.permute.xlu0 %429
      %431 = vset.pattern.permute.xlu0 2
      %432 = vperm.xlu0 %431, %v209
      %v433 = vpop.permute.xlu0 %432
      %434 = vset.pattern.permute.xlu0 2
      %435 = vperm.xlu0 %434, %v210
      %v436 = vpop.permute.xlu0 %435
      %437 = vset.pattern.permute.xlu0 2
      %438 = vperm.xlu0 %437, %v211
      %v439 = vpop.permute.xlu0 %438
      %440 = vset.pattern.permute.xlu0 2
      %441 = vperm.xlu0 %440, %v212
      %v442 = vpop.permute.xlu0 %441
      %443 = vset.pattern.permute.xlu0 2
      %444 = vperm.xlu0 %443, %v213
      %v445 = vpop.permute.xlu0 %444
      %446 = vset.pattern.permute.xlu0 2
      %447 = vperm.xlu0 %446, %v214
      %v448 = vpop.permute.xlu0 %447
      %449 = vset.pattern.permute.xlu0 2
      %450 = vperm.xlu0 %449, %v215
      %v451 = vpop.permute.xlu0 %450
      %452 = vset.pattern.permute.xlu0 2
      %453 = vperm.xlu0 %452, %v216
      %v454 = vpop.permute.xlu0 %453
      %455 = vset.pattern.permute.xlu0 2
      %456 = vperm.xlu0 %455, %v217
      %v457 = vpop.permute.xlu0 %456
      %458 = vset.pattern.permute.xlu0 2
      %459 = vperm.xlu0 %458, %v218
      %v460 = vpop.permute.xlu0 %459
      %vm461 = vcmp.eq.s32.totalorder %v415, %v220
      %vm462 = vcmp.eq.s32.totalorder %v418, %v220
      %vm463 = vcmp.eq.s32.totalorder %v421, %v220
      %vm464 = vcmp.eq.s32.totalorder %v424, %v220
      %vm465 = vcmp.eq.s32.totalorder %v427, %v220
      %vm466 = vcmp.eq.s32.totalorder %v430, %v220
      %vm467 = vcmp.eq.s32.totalorder %v433, %v220
      %vm468 = vcmp.eq.s32.totalorder %v436, %v220
      %vm469 = vcmp.eq.s32.totalorder %v439, %v220
      %vm470 = vcmp.eq.s32.totalorder %v442, %v220
      %vm471 = vcmp.eq.s32.totalorder %v445, %v220
      %vm472 = vcmp.eq.s32.totalorder %v448, %v220
      %vm473 = vcmp.eq.s32.totalorder %v451, %v220
      %vm474 = vcmp.eq.s32.totalorder %v454, %v220
      %vm475 = vcmp.eq.s32.totalorder %v457, %v220
      %vm476 = vcmp.eq.s32.totalorder %v460, %v220
      %v477 = vsel %vm461, 1.0, 0.0
      %v478 = vsel %vm462, 1.0, 0.0
      %v479 = vsel %vm463, 1.0, 0.0
      %v480 = vsel %vm464, 1.0, 0.0
      %v481 = vsel %vm465, 1.0, 0.0
      %v482 = vsel %vm466, 1.0, 0.0
      %v483 = vsel %vm467, 1.0, 0.0
      %v484 = vsel %vm468, 1.0, 0.0
      %v485 = vsel %vm469, 1.0, 0.0
      %v486 = vsel %vm470, 1.0, 0.0
      %v487 = vsel %vm471, 1.0, 0.0
      %v488 = vsel %vm472, 1.0, 0.0
      %v489 = vsel %vm473, 1.0, 0.0
      %v490 = vsel %vm474, 1.0, 0.0
      %v491 = vsel %vm475, 1.0, 0.0
      %v492 = vsel %vm476, 1.0, 0.0
      %v493 = vadd.f32 %v397, %v477
      %v494 = vadd.f32 %v398, %v478
      %v495 = vadd.f32 %v399, %v479
      %v496 = vadd.f32 %v400, %v480
      %v497 = vadd.f32 %v401, %v481
      %v498 = vadd.f32 %v402, %v482
      %v499 = vadd.f32 %v403, %v483
      %v500 = vadd.f32 %v404, %v484
      %v501 = vadd.f32 %v405, %v485
      %v502 = vadd.f32 %v406, %v486
      %v503 = vadd.f32 %v407, %v487
      %v504 = vadd.f32 %v408, %v488
      %v505 = vadd.f32 %v409, %v489
      %v506 = vadd.f32 %v410, %v490
      %v507 = vadd.f32 %v411, %v491
      %v508 = vadd.f32 %v412, %v492
      %509 = vset.pattern.permute.xlu0 3
      %510 = vperm.xlu0 %509, %v203
      %v511 = vpop.permute.xlu0 %510
      %512 = vset.pattern.permute.xlu0 3
      %513 = vperm.xlu0 %512, %v204
      %v514 = vpop.permute.xlu0 %513
      %515 = vset.pattern.permute.xlu0 3
      %516 = vperm.xlu0 %515, %v205
      %v517 = vpop.permute.xlu0 %516
      %518 = vset.pattern.permute.xlu0 3
      %519 = vperm.xlu0 %518, %v206
      %v520 = vpop.permute.xlu0 %519
      %521 = vset.pattern.permute.xlu0 3
      %522 = vperm.xlu0 %521, %v207
      %v523 = vpop.permute.xlu0 %522
      %524 = vset.pattern.permute.xlu0 3
      %525 = vperm.xlu0 %524, %v208
      %v526 = vpop.permute.xlu0 %525
      %527 = vset.pattern.permute.xlu0 3
      %528 = vperm.xlu0 %527, %v209
      %v529 = vpop.permute.xlu0 %528
      %530 = vset.pattern.permute.xlu0 3
      %531 = vperm.xlu0 %530, %v210
      %v532 = vpop.permute.xlu0 %531
      %533 = vset.pattern.permute.xlu0 3
      %534 = vperm.xlu0 %533, %v211
      %v535 = vpop.permute.xlu0 %534
      %536 = vset.pattern.permute.xlu0 3
      %537 = vperm.xlu0 %536, %v212
      %v538 = vpop.permute.xlu0 %537
      %539 = vset.pattern.permute.xlu0 3
      %540 = vperm.xlu0 %539, %v213
      %v541 = vpop.permute.xlu0 %540
      %542 = vset.pattern.permute.xlu0 3
      %543 = vperm.xlu0 %542, %v214
      %v544 = vpop.permute.xlu0 %543
      %545 = vset.pattern.permute.xlu0 3
      %546 = vperm.xlu0 %545, %v215
      %v547 = vpop.permute.xlu0 %546
      %548 = vset.pattern.permute.xlu0 3
      %549 = vperm.xlu0 %548, %v216
      %v550 = vpop.permute.xlu0 %549
      %551 = vset.pattern.permute.xlu0 3
      %552 = vperm.xlu0 %551, %v217
      %v553 = vpop.permute.xlu0 %552
      %554 = vset.pattern.permute.xlu0 3
      %555 = vperm.xlu0 %554, %v218
      %v556 = vpop.permute.xlu0 %555
      %vm557 = vcmp.eq.s32.totalorder %v511, %v220
      %vm558 = vcmp.eq.s32.totalorder %v514, %v220
      %vm559 = vcmp.eq.s32.totalorder %v517, %v220
      %vm560 = vcmp.eq.s32.totalorder %v520, %v220
      %vm561 = vcmp.eq.s32.totalorder %v523, %v220
      %vm562 = vcmp.eq.s32.totalorder %v526, %v220
      %vm563 = vcmp.eq.s32.totalorder %v529, %v220
      %vm564 = vcmp.eq.s32.totalorder %v532, %v220
      %vm565 = vcmp.eq.s32.totalorder %v535, %v220
      %vm566 = vcmp.eq.s32.totalorder %v538, %v220
      %vm567 = vcmp.eq.s32.totalorder %v541, %v220
      %vm568 = vcmp.eq.s32.totalorder %v544, %v220
      %vm569 = vcmp.eq.s32.totalorder %v547, %v220
      %vm570 = vcmp.eq.s32.totalorder %v550, %v220
      %vm571 = vcmp.eq.s32.totalorder %v553, %v220
      %vm572 = vcmp.eq.s32.totalorder %v556, %v220
      %v573 = vsel %vm557, 1.0, 0.0
      %v574 = vsel %vm558, 1.0, 0.0
      %v575 = vsel %vm559, 1.0, 0.0
      %v576 = vsel %vm560, 1.0, 0.0
      %v577 = vsel %vm561, 1.0, 0.0
      %v578 = vsel %vm562, 1.0, 0.0
      %v579 = vsel %vm563, 1.0, 0.0
      %v580 = vsel %vm564, 1.0, 0.0
      %v581 = vsel %vm565, 1.0, 0.0
      %v582 = vsel %vm566, 1.0, 0.0
      %v583 = vsel %vm567, 1.0, 0.0
      %v584 = vsel %vm568, 1.0, 0.0
      %v585 = vsel %vm569, 1.0, 0.0
      %v586 = vsel %vm570, 1.0, 0.0
      %v587 = vsel %vm571, 1.0, 0.0
      %v588 = vsel %vm572, 1.0, 0.0
      %v589 = vadd.f32 %v493, %v573
      %v590 = vadd.f32 %v494, %v574
      %v591 = vadd.f32 %v495, %v575
      %v592 = vadd.f32 %v496, %v576
      %v593 = vadd.f32 %v497, %v577
      %v594 = vadd.f32 %v498, %v578
      %v595 = vadd.f32 %v499, %v579
      %v596 = vadd.f32 %v500, %v580
      %v597 = vadd.f32 %v501, %v581
      %v598 = vadd.f32 %v502, %v582
      %v599 = vadd.f32 %v503, %v583
      %v600 = vadd.f32 %v504, %v584
      %v601 = vadd.f32 %v505, %v585
      %v602 = vadd.f32 %v506, %v586
      %v603 = vadd.f32 %v507, %v587
      %v604 = vadd.f32 %v508, %v588
      %605 = vset.pattern.permute.xlu0 4
      %606 = vperm.xlu0 %605, %v203
      %v607 = vpop.permute.xlu0 %606
      %608 = vset.pattern.permute.xlu0 4
      %609 = vperm.xlu0 %608, %v204
      %v610 = vpop.permute.xlu0 %609
      %611 = vset.pattern.permute.xlu0 4
      %612 = vperm.xlu0 %611, %v205
      %v613 = vpop.permute.xlu0 %612
      %614 = vset.pattern.permute.xlu0 4
      %615 = vperm.xlu0 %614, %v206
      %v616 = vpop.permute.xlu0 %615
      %617 = vset.pattern.permute.xlu0 4
      %618 = vperm.xlu0 %617, %v207
      %v619 = vpop.permute.xlu0 %618
      %620 = vset.pattern.permute.xlu0 4
      %621 = vperm.xlu0 %620, %v208
      %v622 = vpop.permute.xlu0 %621
      %623 = vset.pattern.permute.xlu0 4
      %624 = vperm.xlu0 %623, %v209
      %v625 = vpop.permute.xlu0 %624
      %626 = vset.pattern.permute.xlu0 4
      %627 = vperm.xlu0 %626, %v210
      %v628 = vpop.permute.xlu0 %627
      %629 = vset.pattern.permute.xlu0 4
      %630 = vperm.xlu0 %629, %v211
      %v631 = vpop.permute.xlu0 %630
      %632 = vset.pattern.permute.xlu0 4
      %633 = vperm.xlu0 %632, %v212
      %v634 = vpop.permute.xlu0 %633
      %635 = vset.pattern.permute.xlu0 4
      %636 = vperm.xlu0 %635, %v213
      %v637 = vpop.permute.xlu0 %636
      %638 = vset.pattern.permute.xlu0 4
      %639 = vperm.xlu0 %638, %v214
      %v640 = vpop.permute.xlu0 %639
      %641 = vset.pattern.permute.xlu0 4
      %642 = vperm.xlu0 %641, %v215
      %v643 = vpop.permute.xlu0 %642
      %644 = vset.pattern.permute.xlu0 4
      %645 = vperm.xlu0 %644, %v216
      %v646 = vpop.permute.xlu0 %645
      %647 = vset.pattern.permute.xlu0 4
      %648 = vperm.xlu0 %647, %v217
      %v649 = vpop.permute.xlu0 %648
      %650 = vset.pattern.permute.xlu0 4
      %651 = vperm.xlu0 %650, %v218
      %v652 = vpop.permute.xlu0 %651
      %vm653 = vcmp.eq.s32.totalorder %v607, %v220
      %vm654 = vcmp.eq.s32.totalorder %v610, %v220
      %vm655 = vcmp.eq.s32.totalorder %v613, %v220
      %vm656 = vcmp.eq.s32.totalorder %v616, %v220
      %vm657 = vcmp.eq.s32.totalorder %v619, %v220
      %vm658 = vcmp.eq.s32.totalorder %v622, %v220
      %vm659 = vcmp.eq.s32.totalorder %v625, %v220
      %vm660 = vcmp.eq.s32.totalorder %v628, %v220
      %vm661 = vcmp.eq.s32.totalorder %v631, %v220
      %vm662 = vcmp.eq.s32.totalorder %v634, %v220
      %vm663 = vcmp.eq.s32.totalorder %v637, %v220
      %vm664 = vcmp.eq.s32.totalorder %v640, %v220
      %vm665 = vcmp.eq.s32.totalorder %v643, %v220
      %vm666 = vcmp.eq.s32.totalorder %v646, %v220
      %vm667 = vcmp.eq.s32.totalorder %v649, %v220
      %vm668 = vcmp.eq.s32.totalorder %v652, %v220
      %v669 = vsel %vm653, 1.0, 0.0
      %v670 = vsel %vm654, 1.0, 0.0
      %v671 = vsel %vm655, 1.0, 0.0
      %v672 = vsel %vm656, 1.0, 0.0
      %v673 = vsel %vm657, 1.0, 0.0
      %v674 = vsel %vm658, 1.0, 0.0
      %v675 = vsel %vm659, 1.0, 0.0
      %v676 = vsel %vm660, 1.0, 0.0
      %v677 = vsel %vm661, 1.0, 0.0
      %v678 = vsel %vm662, 1.0, 0.0
      %v679 = vsel %vm663, 1.0, 0.0
      %v680 = vsel %vm664, 1.0, 0.0
      %v681 = vsel %vm665, 1.0, 0.0
      %v682 = vsel %vm666, 1.0, 0.0
      %v683 = vsel %vm667, 1.0, 0.0
      %v684 = vsel %vm668, 1.0, 0.0
      %v685 = vadd.f32 %v589, %v669
      %v686 = vadd.f32 %v590, %v670
      %v687 = vadd.f32 %v591, %v671
      %v688 = vadd.f32 %v592, %v672
      %v689 = vadd.f32 %v593, %v673
      %v690 = vadd.f32 %v594, %v674
      %v691 = vadd.f32 %v595, %v675
      %v692 = vadd.f32 %v596, %v676
      %v693 = vadd.f32 %v597, %v677
      %v694 = vadd.f32 %v598, %v678
      %v695 = vadd.f32 %v599, %v679
      %v696 = vadd.f32 %v600, %v680
      %v697 = vadd.f32 %v601, %v681
      %v698 = vadd.f32 %v602, %v682
      %v699 = vadd.f32 %v603, %v683
      %v700 = vadd.f32 %v604, %v684
      %701 = vset.pattern.permute.xlu0 5
      %702 = vperm.xlu0 %701, %v203
      %v703 = vpop.permute.xlu0 %702
      %704 = vset.pattern.permute.xlu0 5
      %705 = vperm.xlu0 %704, %v204
      %v706 = vpop.permute.xlu0 %705
      %707 = vset.pattern.permute.xlu0 5
      %708 = vperm.xlu0 %707, %v205
      %v709 = vpop.permute.xlu0 %708
      %710 = vset.pattern.permute.xlu0 5
      %711 = vperm.xlu0 %710, %v206
      %v712 = vpop.permute.xlu0 %711
      %713 = vset.pattern.permute.xlu0 5
      %714 = vperm.xlu0 %713, %v207
      %v715 = vpop.permute.xlu0 %714
      %716 = vset.pattern.permute.xlu0 5
      %717 = vperm.xlu0 %716, %v208
      %v718 = vpop.permute.xlu0 %717
      %719 = vset.pattern.permute.xlu0 5
      %720 = vperm.xlu0 %719, %v209
      %v721 = vpop.permute.xlu0 %720
      %722 = vset.pattern.permute.xlu0 5
      %723 = vperm.xlu0 %722, %v210
      %v724 = vpop.permute.xlu0 %723
      %725 = vset.pattern.permute.xlu0 5
      %726 = vperm.xlu0 %725, %v211
      %v727 = vpop.permute.xlu0 %726
      %728 = vset.pattern.permute.xlu0 5
      %729 = vperm.xlu0 %728, %v212
      %v730 = vpop.permute.xlu0 %729
      %731 = vset.pattern.permute.xlu0 5
      %732 = vperm.xlu0 %731, %v213
      %v733 = vpop.permute.xlu0 %732
      %734 = vset.pattern.permute.xlu0 5
      %735 = vperm.xlu0 %734, %v214
      %v736 = vpop.permute.xlu0 %735
      %737 = vset.pattern.permute.xlu0 5
      %738 = vperm.xlu0 %737, %v215
      %v739 = vpop.permute.xlu0 %738
      %740 = vset.pattern.permute.xlu0 5
      %741 = vperm.xlu0 %740, %v216
      %v742 = vpop.permute.xlu0 %741
      %743 = vset.pattern.permute.xlu0 5
      %744 = vperm.xlu0 %743, %v217
      %v745 = vpop.permute.xlu0 %744
      %746 = vset.pattern.permute.xlu0 5
      %747 = vperm.xlu0 %746, %v218
      %v748 = vpop.permute.xlu0 %747
      %vm749 = vcmp.eq.s32.totalorder %v703, %v220
      %vm750 = vcmp.eq.s32.totalorder %v706, %v220
      %vm751 = vcmp.eq.s32.totalorder %v709, %v220
      %vm752 = vcmp.eq.s32.totalorder %v712, %v220
      %vm753 = vcmp.eq.s32.totalorder %v715, %v220
      %vm754 = vcmp.eq.s32.totalorder %v718, %v220
      %vm755 = vcmp.eq.s32.totalorder %v721, %v220
      %vm756 = vcmp.eq.s32.totalorder %v724, %v220
      %vm757 = vcmp.eq.s32.totalorder %v727, %v220
      %vm758 = vcmp.eq.s32.totalorder %v730, %v220
      %vm759 = vcmp.eq.s32.totalorder %v733, %v220
      %vm760 = vcmp.eq.s32.totalorder %v736, %v220
      %vm761 = vcmp.eq.s32.totalorder %v739, %v220
      %vm762 = vcmp.eq.s32.totalorder %v742, %v220
      %vm763 = vcmp.eq.s32.totalorder %v745, %v220
      %vm764 = vcmp.eq.s32.totalorder %v748, %v220
      %v765 = vsel %vm749, 1.0, 0.0
      %v766 = vsel %vm750, 1.0, 0.0
      %v767 = vsel %vm751, 1.0, 0.0
      %v768 = vsel %vm752, 1.0, 0.0
      %v769 = vsel %vm753, 1.0, 0.0
      %v770 = vsel %vm754, 1.0, 0.0
      %v771 = vsel %vm755, 1.0, 0.0
      %v772 = vsel %vm756, 1.0, 0.0
      %v773 = vsel %vm757, 1.0, 0.0
      %v774 = vsel %vm758, 1.0, 0.0
      %v775 = vsel %vm759, 1.0, 0.0
      %v776 = vsel %vm760, 1.0, 0.0
      %v777 = vsel %vm761, 1.0, 0.0
      %v778 = vsel %vm762, 1.0, 0.0
      %v779 = vsel %vm763, 1.0, 0.0
      %v780 = vsel %vm764, 1.0, 0.0
      %v781 = vadd.f32 %v685, %v765
      %v782 = vadd.f32 %v686, %v766
      %v783 = vadd.f32 %v687, %v767
      %v784 = vadd.f32 %v688, %v768
      %v785 = vadd.f32 %v689, %v769
      %v786 = vadd.f32 %v690, %v770
      %v787 = vadd.f32 %v691, %v771
      %v788 = vadd.f32 %v692, %v772
      %v789 = vadd.f32 %v693, %v773
      %v790 = vadd.f32 %v694, %v774
      %v791 = vadd.f32 %v695, %v775
      %v792 = vadd.f32 %v696, %v776
      %v793 = vadd.f32 %v697, %v777
      %v794 = vadd.f32 %v698, %v778
      %v795 = vadd.f32 %v699, %v779
      %v796 = vadd.f32 %v700, %v780
      %797 = vset.pattern.permute.xlu0 6
      %798 = vperm.xlu0 %797, %v203
      %v799 = vpop.permute.xlu0 %798
      %800 = vset.pattern.permute.xlu0 6
      %801 = vperm.xlu0 %800, %v204
      %v802 = vpop.permute.xlu0 %801
      %803 = vset.pattern.permute.xlu0 6
      %804 = vperm.xlu0 %803, %v205
      %v805 = vpop.permute.xlu0 %804
      %806 = vset.pattern.permute.xlu0 6
      %807 = vperm.xlu0 %806, %v206
      %v808 = vpop.permute.xlu0 %807
      %809 = vset.pattern.permute.xlu0 6
      %810 = vperm.xlu0 %809, %v207
      %v811 = vpop.permute.xlu0 %810
      %812 = vset.pattern.permute.xlu0 6
      %813 = vperm.xlu0 %812, %v208
      %v814 = vpop.permute.xlu0 %813
      %815 = vset.pattern.permute.xlu0 6
      %816 = vperm.xlu0 %815, %v209
      %v817 = vpop.permute.xlu0 %816
      %818 = vset.pattern.permute.xlu0 6
      %819 = vperm.xlu0 %818, %v210
      %v820 = vpop.permute.xlu0 %819
      %821 = vset.pattern.permute.xlu0 6
      %822 = vperm.xlu0 %821, %v211
      %v823 = vpop.permute.xlu0 %822
      %824 = vset.pattern.permute.xlu0 6
      %825 = vperm.xlu0 %824, %v212
      %v826 = vpop.permute.xlu0 %825
      %827 = vset.pattern.permute.xlu0 6
      %828 = vperm.xlu0 %827, %v213
      %v829 = vpop.permute.xlu0 %828
      %830 = vset.pattern.permute.xlu0 6
      %831 = vperm.xlu0 %830, %v214
      %v832 = vpop.permute.xlu0 %831
      %833 = vset.pattern.permute.xlu0 6
      %834 = vperm.xlu0 %833, %v215
      %v835 = vpop.permute.xlu0 %834
      %836 = vset.pattern.permute.xlu0 6
      %837 = vperm.xlu0 %836, %v216
      %v838 = vpop.permute.xlu0 %837
      %839 = vset.pattern.permute.xlu0 6
      %840 = vperm.xlu0 %839, %v217
      %v841 = vpop.permute.xlu0 %840
      %842 = vset.pattern.permute.xlu0 6
      %843 = vperm.xlu0 %842, %v218
      %v844 = vpop.permute.xlu0 %843
      %vm845 = vcmp.eq.s32.totalorder %v799, %v220
      %vm846 = vcmp.eq.s32.totalorder %v802, %v220
      %vm847 = vcmp.eq.s32.totalorder %v805, %v220
      %vm848 = vcmp.eq.s32.totalorder %v808, %v220
      %vm849 = vcmp.eq.s32.totalorder %v811, %v220
      %vm850 = vcmp.eq.s32.totalorder %v814, %v220
      %vm851 = vcmp.eq.s32.totalorder %v817, %v220
      %vm852 = vcmp.eq.s32.totalorder %v820, %v220
      %vm853 = vcmp.eq.s32.totalorder %v823, %v220
      %vm854 = vcmp.eq.s32.totalorder %v826, %v220
      %vm855 = vcmp.eq.s32.totalorder %v829, %v220
      %vm856 = vcmp.eq.s32.totalorder %v832, %v220
      %vm857 = vcmp.eq.s32.totalorder %v835, %v220
      %vm858 = vcmp.eq.s32.totalorder %v838, %v220
      %vm859 = vcmp.eq.s32.totalorder %v841, %v220
      %vm860 = vcmp.eq.s32.totalorder %v844, %v220
      %v861 = vsel %vm845, 1.0, 0.0
      %v862 = vsel %vm846, 1.0, 0.0
      %v863 = vsel %vm847, 1.0, 0.0
      %v864 = vsel %vm848, 1.0, 0.0
      %v865 = vsel %vm849, 1.0, 0.0
      %v866 = vsel %vm850, 1.0, 0.0
      %v867 = vsel %vm851, 1.0, 0.0
      %v868 = vsel %vm852, 1.0, 0.0
      %v869 = vsel %vm853, 1.0, 0.0
      %v870 = vsel %vm854, 1.0, 0.0
      %v871 = vsel %vm855, 1.0, 0.0
      %v872 = vsel %vm856, 1.0, 0.0
      %v873 = vsel %vm857, 1.0, 0.0
      %v874 = vsel %vm858, 1.0, 0.0
      %v875 = vsel %vm859, 1.0, 0.0
      %v876 = vsel %vm860, 1.0, 0.0
      %v877 = vadd.f32 %v781, %v861
      %v878 = vadd.f32 %v782, %v862
      %v879 = vadd.f32 %v783, %v863
      %v880 = vadd.f32 %v784, %v864
      %v881 = vadd.f32 %v785, %v865
      %v882 = vadd.f32 %v786, %v866
      %v883 = vadd.f32 %v787, %v867
      %v884 = vadd.f32 %v788, %v868
      %v885 = vadd.f32 %v789, %v869
      %v886 = vadd.f32 %v790, %v870
      %v887 = vadd.f32 %v791, %v871
      %v888 = vadd.f32 %v792, %v872
      %v889 = vadd.f32 %v793, %v873
      %v890 = vadd.f32 %v794, %v874
      %v891 = vadd.f32 %v795, %v875
      %v892 = vadd.f32 %v796, %v876
      %893 = vset.pattern.permute.xlu0 7
      %894 = vperm.xlu0 %893, %v203
      %v895 = vpop.permute.xlu0 %894
      %896 = vset.pattern.permute.xlu0 7
      %897 = vperm.xlu0 %896, %v204
      %v898 = vpop.permute.xlu0 %897
      %899 = vset.pattern.permute.xlu0 7
      %900 = vperm.xlu0 %899, %v205
      %v901 = vpop.permute.xlu0 %900
      %902 = vset.pattern.permute.xlu0 7
      %903 = vperm.xlu0 %902, %v206
      %v904 = vpop.permute.xlu0 %903
      %905 = vset.pattern.permute.xlu0 7
      %906 = vperm.xlu0 %905, %v207
      %v907 = vpop.permute.xlu0 %906
      %908 = vset.pattern.permute.xlu0 7
      %909 = vperm.xlu0 %908, %v208
      %v910 = vpop.permute.xlu0 %909
      %911 = vset.pattern.permute.xlu0 7
      %912 = vperm.xlu0 %911, %v209
      %v913 = vpop.permute.xlu0 %912
      %914 = vset.pattern.permute.xlu0 7
      %915 = vperm.xlu0 %914, %v210
      %v916 = vpop.permute.xlu0 %915
      %917 = vset.pattern.permute.xlu0 7
      %918 = vperm.xlu0 %917, %v211
      %v919 = vpop.permute.xlu0 %918
      %920 = vset.pattern.permute.xlu0 7
      %921 = vperm.xlu0 %920, %v212
      %v922 = vpop.permute.xlu0 %921
      %923 = vset.pattern.permute.xlu0 7
      %924 = vperm.xlu0 %923, %v213
      %v925 = vpop.permute.xlu0 %924
      %926 = vset.pattern.permute.xlu0 7
      %927 = vperm.xlu0 %926, %v214
      %v928 = vpop.permute.xlu0 %927
      %929 = vset.pattern.permute.xlu0 7
      %930 = vperm.xlu0 %929, %v215
      %v931 = vpop.permute.xlu0 %930
      %932 = vset.pattern.permute.xlu0 7
      %933 = vperm.xlu0 %932, %v216
      %v934 = vpop.permute.xlu0 %933
      %935 = vset.pattern.permute.xlu0 7
      %936 = vperm.xlu0 %935, %v217
      %v937 = vpop.permute.xlu0 %936
      %938 = vset.pattern.permute.xlu0 7
      %939 = vperm.xlu0 %938, %v218
      %v940 = vpop.permute.xlu0 %939
      %vm941 = vcmp.eq.s32.totalorder %v895, %v220
      %vm942 = vcmp.eq.s32.totalorder %v898, %v220
      %vm943 = vcmp.eq.s32.totalorder %v901, %v220
      %vm944 = vcmp.eq.s32.totalorder %v904, %v220
      %vm945 = vcmp.eq.s32.totalorder %v907, %v220
      %vm946 = vcmp.eq.s32.totalorder %v910, %v220
      %vm947 = vcmp.eq.s32.totalorder %v913, %v220
      %vm948 = vcmp.eq.s32.totalorder %v916, %v220
      %vm949 = vcmp.eq.s32.totalorder %v919, %v220
      %vm950 = vcmp.eq.s32.totalorder %v922, %v220
      %vm951 = vcmp.eq.s32.totalorder %v925, %v220
      %vm952 = vcmp.eq.s32.totalorder %v928, %v220
      %vm953 = vcmp.eq.s32.totalorder %v931, %v220
      %vm954 = vcmp.eq.s32.totalorder %v934, %v220
      %vm955 = vcmp.eq.s32.totalorder %v937, %v220
      %vm956 = vcmp.eq.s32.totalorder %v940, %v220
      %v957 = vsel %vm941, 1.0, 0.0
      %v958 = vsel %vm942, 1.0, 0.0
      %v959 = vsel %vm943, 1.0, 0.0
      %v960 = vsel %vm944, 1.0, 0.0
      %v961 = vsel %vm945, 1.0, 0.0
      %v962 = vsel %vm946, 1.0, 0.0
      %v963 = vsel %vm947, 1.0, 0.0
      %v964 = vsel %vm948, 1.0, 0.0
      %v965 = vsel %vm949, 1.0, 0.0
      %v966 = vsel %vm950, 1.0, 0.0
      %v967 = vsel %vm951, 1.0, 0.0
      %v968 = vsel %vm952, 1.0, 0.0
      %v969 = vsel %vm953, 1.0, 0.0
      %v970 = vsel %vm954, 1.0, 0.0
      %v971 = vsel %vm955, 1.0, 0.0
      %v972 = vsel %vm956, 1.0, 0.0
      %v973 = vadd.f32 %v877, %v957
      %v974 = vadd.f32 %v878, %v958
      %v975 = vadd.f32 %v879, %v959
      %v976 = vadd.f32 %v880, %v960
      %v977 = vadd.f32 %v881, %v961
      %v978 = vadd.f32 %v882, %v962
      %v979 = vadd.f32 %v883, %v963
      %v980 = vadd.f32 %v884, %v964
      %v981 = vadd.f32 %v885, %v965
      %v982 = vadd.f32 %v886, %v966
      %v983 = vadd.f32 %v887, %v967
      %v984 = vadd.f32 %v888, %v968
      %v985 = vadd.f32 %v889, %v969
      %v986 = vadd.f32 %v890, %v970
      %v987 = vadd.f32 %v891, %v971
      %v988 = vadd.f32 %v892, %v972
      %v989 = vpack.c.bf16 %v974, %v973
      %v990 = vpack.c.bf16 %v976, %v975
      %v991 = vpack.c.bf16 %v978, %v977
      %v992 = vpack.c.bf16 %v980, %v979
      %v993 = vpack.c.bf16 %v982, %v981
      %v994 = vpack.c.bf16 %v984, %v983
      %v995 = vpack.c.bf16 %v986, %v985
      %v996 = vpack.c.bf16 %v988, %v987
      %v997 = vld [vmem:[%s1] sm:$0xf]
      %v998 = vld [vmem:[%s1 + $0x4] sm:$0xf]
      %v999 = vld [vmem:[%s1 + $0x8] sm:$0xf]
      %v1000 = vld [vmem:[%s1 + $0xc] sm:$0xf]
      %v1001 = vld [vmem:[%s1 + $0x10] sm:$0xf]
      %v1002 = vld [vmem:[%s1 + $0x14] sm:$0xf]
      %v1003 = vld [vmem:[%s1 + $0x18] sm:$0xf]
      %v1004 = vld [vmem:[%s1 + $0x1c] sm:$0xf]
      %v1005 = vld [vmem:[%s1 + $0x20] sm:$0xf]
      %v1006 = vld [vmem:[%s1 + $0x24] sm:$0xf]
      %v1007 = vld [vmem:[%s1 + $0x28] sm:$0xf]
      %v1008 = vld [vmem:[%s1 + $0x2c] sm:$0xf]
      %v1009 = vld [vmem:[%s1 + $0x30] sm:$0xf]
      %v1010 = vld [vmem:[%s1 + $0x34] sm:$0xf]
      %v1011 = vld [vmem:[%s1 + $0x38] sm:$0xf]
      %v1012 = vld [vmem:[%s1 + $0x3c] sm:$0xf]
      %v1013 = vld [vmem:[%s2] sm:$0xf]
      %v1014 = vld [vmem:[%s2 + $0x4] sm:$0xf]
      %v1015 = vld [vmem:[%s2 + $0x8] sm:$0xf]
      %v1016 = vld [vmem:[%s2 + $0xc] sm:$0xf]
      %v1017 = vld [vmem:[%s2 + $0x10] sm:$0xf]
      %v1018 = vld [vmem:[%s2 + $0x14] sm:$0xf]
      %v1019 = vld [vmem:[%s2 + $0x18] sm:$0xf]
      %v1020 = vld [vmem:[%s2 + $0x1c] sm:$0xf]
      %v1021 = vld [vmem:[%s2 + $0x20] sm:$0xf]
      %v1022 = vld [vmem:[%s2 + $0x24] sm:$0xf]
      %v1023 = vld [vmem:[%s2 + $0x28] sm:$0xf]
      %v1024 = vld [vmem:[%s2 + $0x2c] sm:$0xf]
      %v1025 = vld [vmem:[%s2 + $0x30] sm:$0xf]
      %v1026 = vld [vmem:[%s2 + $0x34] sm:$0xf]
      %v1027 = vld [vmem:[%s2 + $0x38] sm:$0xf]
      %v1028 = vld [vmem:[%s2 + $0x3c] sm:$0xf]
      %v1045 = vunpack.c.l.b16 %v1013
      %v1046 = vunpack.c.l.b16 %v1014
      %v1047 = vunpack.c.l.b16 %v1015
      %v1048 = vunpack.c.l.b16 %v1016
      %v1049 = vunpack.c.l.b16 %v1017
      %v1050 = vunpack.c.l.b16 %v1018
      %v1051 = vunpack.c.l.b16 %v1019
      %v1052 = vunpack.c.l.b16 %v1020
      %v1053 = vunpack.c.l.b16 %v1021
      %v1054 = vunpack.c.l.b16 %v1022
      %v1055 = vunpack.c.l.b16 %v1023
      %v1056 = vunpack.c.l.b16 %v1024
      %v1057 = vunpack.c.l.b16 %v1025
      %v1058 = vunpack.c.l.b16 %v1026
      %v1059 = vunpack.c.l.b16 %v1027
      %v1060 = vunpack.c.l.b16 %v1028
      %v1061 = vpack.c.b16 %v1046, %v1045
      %v1062 = vpack.c.b16 %v1048, %v1047
      %v1063 = vpack.c.b16 %v1050, %v1049
      %v1064 = vpack.c.b16 %v1052, %v1051
      %v1065 = vpack.c.b16 %v1054, %v1053
      %v1066 = vpack.c.b16 %v1056, %v1055
      %v1067 = vpack.c.b16 %v1058, %v1057
      %v1068 = vpack.c.b16 %v1060, %v1059
      %1077 = vmatprep.subr.bf16.mxu0 0
      %1078 = vmatpush1.bf16.msra.mxu0 %v1061
      %1079 = vmatprep.subr.bf16.mxu0 0
      %1080 = vmatpush1.bf16.msra.mxu0 %v1062
      %1081 = vmatprep.subr.bf16.mxu0 0
      %1082 = vmatpush1.bf16.msra.mxu0 %v1063
      %1083 = vmatprep.subr.bf16.mxu0 0
      %1084 = vmatpush1.bf16.msra.mxu0 %v1064
      %1085 = vmatprep.subr.bf16.mxu0 0
      %1086 = vmatpush1.bf16.msra.mxu0 %v1065
      %1087 = vmatprep.subr.bf16.mxu0 0
      %1088 = vmatpush1.bf16.msra.mxu0 %v1066
      %1089 = vmatprep.subr.bf16.mxu0 0
      %1090 = vmatpush1.bf16.msra.mxu0 %v1067
      %1091 = vmatprep.subr.bf16.mxu0 0
      %1092 = vmatpush1.bf16.msra.mxu0 %v1068
      %1093 = vmatprep.subr.bf16.mxu0 0
      %1094 = vmatpush1.bf16.msra.mxu0 0
      %1095 = vmatprep.subr.bf16.mxu0 0
      %1096 = vmatpush1.bf16.msra.mxu0 0
      %1097 = vmatprep.subr.bf16.mxu0 0
      %1098 = vmatpush1.bf16.msra.mxu0 0
      %1099 = vmatprep.subr.bf16.mxu0 0
      %1100 = vmatpush1.bf16.msra.mxu0 0
      %1101 = vmatprep.subr.bf16.mxu0 0
      %1102 = vmatpush1.bf16.msra.mxu0 0
      %1103 = vmatprep.subr.bf16.mxu0 0
      %1104 = vmatpush1.bf16.msra.mxu0 0
      %1105 = vmatprep.subr.bf16.mxu0 0
      %1106 = vmatpush1.bf16.msra.mxu0 0
      %1107 = vmatprep.subr.bf16.mxu0 0
      %1108 = vmatpush1.bf16.msra.mxu0 0
      %1109 = vmatprep.mubr.bf16.mxu0 0
      %1110 = vmatmul.mubr.bf16.gmra.mrb[0].mxu0 %v989
      %v1111 = vpop.f32.mrb[0].mxu0
      %v1112 = vadd.f32 0.0, %v1111
      %v1113 = vpop.f32.mrb[0].mxu0
      %v1114 = vpop.f32.mrb[0].mxu0
      %v1115 = vadd.f32 0.0, %v1114
      %v1116 = vpop.f32.mrb[0].mxu0
      %1117 = vmatprep.mubr.bf16.mxu0 0
      %1118 = vmatmul.mubr.bf16.gmra.mrb[0].mxu0 %v990
      %v1119 = vpop.f32.mrb[0].mxu0
      %v1120 = vadd.f32 0.0, %v1119
      %v1121 = vpop.f32.mrb[0].mxu0
      %v1122 = vpop.f32.mrb[0].mxu0
      %v1123 = vadd.f32 0.0, %v1122
      %v1124 = vpop.f32.mrb[0].mxu0
      %1125 = vmatprep.mubr.bf16.mxu0 0
      %1126 = vmatmul.mubr.bf16.gmra.mrb[0].mxu0 %v991
      %v1127 = vpop.f32.mrb[0].mxu0
      %v1128 = vadd.f32 0.0, %v1127
      %v1129 = vpop.f32.mrb[0].mxu0
      %v1130 = vpop.f32.mrb[0].mxu0
      %v1131 = vadd.f32 0.0, %v1130
      %v1132 = vpop.f32.mrb[0].mxu0
      %1133 = vmatprep.mubr.bf16.mxu0 0
      %1134 = vmatmul.mubr.bf16.gmra.mrb[0].mxu0 %v992
      %v1135 = vpop.f32.mrb[0].mxu0
      %v1136 = vadd.f32 0.0, %v1135
      %v1137 = vpop.f32.mrb[0].mxu0
      %v1138 = vpop.f32.mrb[0].mxu0
      %v1139 = vadd.f32 0.0, %v1138
      %v1140 = vpop.f32.mrb[0].mxu0
      %1141 = vmatprep.mubr.bf16.mxu0 0
      %1142 = vmatmul.mubr.bf16.gmra.mrb[0].mxu0 %v993
      %v1143 = vpop.f32.mrb[0].mxu0
      %v1144 = vadd.f32 0.0, %v1143
      %v1145 = vpop.f32.mrb[0].mxu0
      %v1146 = vpop.f32.mrb[0].mxu0
      %v1147 = vadd.f32 0.0, %v1146
      %v1148 = vpop.f32.mrb[0].mxu0
      %1149 = vmatprep.mubr.bf16.mxu0 0
      %1150 = vmatmul.mubr.bf16.gmra.mrb[0].mxu0 %v994
      %v1151 = vpop.f32.mrb[0].mxu0
      %v1152 = vadd.f32 0.0, %v1151
      %v1153 = vpop.f32.mrb[0].mxu0
      %v1154 = vpop.f32.mrb[0].mxu0
      %v1155 = vadd.f32 0.0, %v1154
      %v1156 = vpop.f32.mrb[0].mxu0
      %1157 = vmatprep.mubr.bf16.mxu0 0
      %1158 = vmatmul.mubr.bf16.gmra.mrb[0].mxu0 %v995
      %v1159 = vpop.f32.mrb[0].mxu0
      %v1160 = vadd.f32 0.0, %v1159
      %v1161 = vpop.f32.mrb[0].mxu0
      %v1162 = vpop.f32.mrb[0].mxu0
      %v1163 = vadd.f32 0.0, %v1162
      %v1164 = vpop.f32.mrb[0].mxu0
      %1165 = vmatprep.mubr.bf16.mxu0 0
      %1166 = vmatmul.mubr.bf16.gmra.mrb[0].mxu0 %v996
      %v1167 = vpop.f32.mrb[0].mxu0
      %v1168 = vadd.f32 0.0, %v1167
      %v1169 = vpop.f32.mrb[0].mxu0
      %v1170 = vpop.f32.mrb[0].mxu0
      %v1171 = vadd.f32 0.0, %v1170
      %v1172 = vpop.f32.mrb[0].mxu0
      %1173 = vdwg.mxu0
      %v1190 = vunpack.c.l.b16 %v997
      %v1191 = vunpack.c.l.b16 %v998
      %v1192 = vunpack.c.l.b16 %v999
      %v1193 = vunpack.c.l.b16 %v1000
      %v1194 = vunpack.c.l.b16 %v1001
      %v1195 = vunpack.c.l.b16 %v1002
      %v1196 = vunpack.c.l.b16 %v1003
      %v1197 = vunpack.c.l.b16 %v1004
      %v1198 = vunpack.c.l.b16 %v1005
      %v1199 = vunpack.c.l.b16 %v1006
      %v1200 = vunpack.c.l.b16 %v1007
      %v1201 = vunpack.c.l.b16 %v1008
      %v1202 = vunpack.c.l.b16 %v1009
      %v1203 = vunpack.c.l.b16 %v1010
      %v1204 = vunpack.c.l.b16 %v1011
      %v1205 = vunpack.c.l.b16 %v1012
      %v1206 = vpack.c.b16 %v1191, %v1190
      %v1207 = vpack.c.b16 %v1193, %v1192
      %v1208 = vpack.c.b16 %v1195, %v1194
      %v1209 = vpack.c.b16 %v1197, %v1196
      %v1210 = vpack.c.b16 %v1199, %v1198
      %v1211 = vpack.c.b16 %v1201, %v1200
      %v1212 = vpack.c.b16 %v1203, %v1202
      %v1213 = vpack.c.b16 %v1205, %v1204
      %1222 = vmatprep.subr.bf16.mxu0 0
      %1223 = vmatpush1.bf16.msra.mxu0 %v1206
      %1224 = vmatprep.subr.bf16.mxu0 0
      %1225 = vmatpush1.bf16.msra.mxu0 %v1207
      %1226 = vmatprep.subr.bf16.mxu0 0
      %1227 = vmatpush1.bf16.msra.mxu0 %v1208
      %1228 = vmatprep.subr.bf16.mxu0 0
      %1229 = vmatpush1.bf16.msra.mxu0 %v1209
      %1230 = vmatprep.subr.bf16.mxu0 0
      %1231 = vmatpush1.bf16.msra.mxu0 %v1210
      %1232 = vmatprep.subr.bf16.mxu0 0
      %1233 = vmatpush1.bf16.msra.mxu0 %v1211
      %1234 = vmatprep.subr.bf16.mxu0 0
      %1235 = vmatpush1.bf16.msra.mxu0 %v1212
      %1236 = vmatprep.subr.bf16.mxu0 0
      %1237 = vmatpush1.bf16.msra.mxu0 %v1213
      %1238 = vmatprep.subr.bf16.mxu0 0
      %1239 = vmatpush1.bf16.msra.mxu0 0
      %1240 = vmatprep.subr.bf16.mxu0 0
      %1241 = vmatpush1.bf16.msra.mxu0 0
      %1242 = vmatprep.subr.bf16.mxu0 0
      %1243 = vmatpush1.bf16.msra.mxu0 0
      %1244 = vmatprep.subr.bf16.mxu0 0
      %1245 = vmatpush1.bf16.msra.mxu0 0
      %1246 = vmatprep.subr.bf16.mxu0 0
      %1247 = vmatpush1.bf16.msra.mxu0 0
      %1248 = vmatprep.subr.bf16.mxu0 0
      %1249 = vmatpush1.bf16.msra.mxu0 0
      %1250 = vmatprep.subr.bf16.mxu0 0
      %1251 = vmatpush1.bf16.msra.mxu0 0
      %1252 = vmatprep.subr.bf16.mxu0 0
      %1253 = vmatpush1.bf16.msra.mxu0 0
      %1254 = vmatprep.mubr.bf16.mxu0 0
      %1255 = vmatmul.mubr.bf16.gmra.mrb[0].mxu0 %v989
      %v1256 = vpop.f32.mrb[0].mxu0
      %v1257 = vadd.f32 %v1112, %v1256
      %v1258 = vpop.f32.mrb[0].mxu0
      %v1259 = vpop.f32.mrb[0].mxu0
      %v1260 = vadd.f32 %v1115, %v1259
      %v1261 = vpop.f32.mrb[0].mxu0
      %1262 = vmatprep.mubr.bf16.mxu0 0
      %1263 = vmatmul.mubr.bf16.gmra.mrb[0].mxu0 %v990
      %v1264 = vpop.f32.mrb[0].mxu0
      %v1265 = vadd.f32 %v1120, %v1264
      %v1266 = vpop.f32.mrb[0].mxu0
      %v1267 = vpop.f32.mrb[0].mxu0
      %v1268 = vadd.f32 %v1123, %v1267
      %v1269 = vpop.f32.mrb[0].mxu0
      %1270 = vmatprep.mubr.bf16.mxu0 0
      %1271 = vmatmul.mubr.bf16.gmra.mrb[0].mxu0 %v991
      %v1272 = vpop.f32.mrb[0].mxu0
      %v1273 = vadd.f32 %v1128, %v1272
      %v1274 = vpop.f32.mrb[0].mxu0
      %v1275 = vpop.f32.mrb[0].mxu0
      %v1276 = vadd.f32 %v1131, %v1275
      %v1277 = vpop.f32.mrb[0].mxu0
      %1278 = vmatprep.mubr.bf16.mxu0 0
      %1279 = vmatmul.mubr.bf16.gmra.mrb[0].mxu0 %v992
      %v1280 = vpop.f32.mrb[0].mxu0
      %v1281 = vadd.f32 %v1136, %v1280
      %v1282 = vpop.f32.mrb[0].mxu0
      %v1283 = vpop.f32.mrb[0].mxu0
      %v1284 = vadd.f32 %v1139, %v1283
      %v1285 = vpop.f32.mrb[0].mxu0
      %1286 = vmatprep.mubr.bf16.mxu0 0
      %1287 = vmatmul.mubr.bf16.gmra.mrb[0].mxu0 %v993
      %v1288 = vpop.f32.mrb[0].mxu0
      %v1289 = vadd.f32 %v1144, %v1288
      %v1290 = vpop.f32.mrb[0].mxu0
      %v1291 = vpop.f32.mrb[0].mxu0
      %v1292 = vadd.f32 %v1147, %v1291
      %v1293 = vpop.f32.mrb[0].mxu0
      %1294 = vmatprep.mubr.bf16.mxu0 0
      %1295 = vmatmul.mubr.bf16.gmra.mrb[0].mxu0 %v994
      %v1296 = vpop.f32.mrb[0].mxu0
      %v1297 = vadd.f32 %v1152, %v1296
      %v1298 = vpop.f32.mrb[0].mxu0
      %v1299 = vpop.f32.mrb[0].mxu0
      %v1300 = vadd.f32 %v1155, %v1299
      %v1301 = vpop.f32.mrb[0].mxu0
      %1302 = vmatprep.mubr.bf16.mxu0 0
      %1303 = vmatmul.mubr.bf16.gmra.mrb[0].mxu0 %v995
      %v1304 = vpop.f32.mrb[0].mxu0
      %v1305 = vadd.f32 %v1160, %v1304
      %v1306 = vpop.f32.mrb[0].mxu0
      %v1307 = vpop.f32.mrb[0].mxu0
      %v1308 = vadd.f32 %v1163, %v1307
      %v1309 = vpop.f32.mrb[0].mxu0
      %1310 = vmatprep.mubr.bf16.mxu0 0
      %1311 = vmatmul.mubr.bf16.gmra.mrb[0].mxu0 %v996
      %v1312 = vpop.f32.mrb[0].mxu0
      %v1313 = vadd.f32 %v1168, %v1312
      %v1314 = vpop.f32.mrb[0].mxu0
      %v1315 = vpop.f32.mrb[0].mxu0
      %v1316 = vadd.f32 %v1171, %v1315
      %v1317 = vpop.f32.mrb[0].mxu0
      %1318 = vdwg.mxu0
      %v1319 = vmul.f32 %v1257, %v1257
      %v1320 = vmul.f32 %v1260, %v1260
      %v1321 = vmul.f32 %v1265, %v1265
      %v1322 = vmul.f32 %v1268, %v1268
      %v1323 = vmul.f32 %v1273, %v1273
      %v1324 = vmul.f32 %v1276, %v1276
      %v1325 = vmul.f32 %v1281, %v1281
      %v1326 = vmul.f32 %v1284, %v1284
      %v1327 = vmul.f32 %v1289, %v1289
      %v1328 = vmul.f32 %v1292, %v1292
      %v1329 = vmul.f32 %v1297, %v1297
      %v1330 = vmul.f32 %v1300, %v1300
      %v1331 = vmul.f32 %v1305, %v1305
      %v1332 = vmul.f32 %v1308, %v1308
      %v1333 = vmul.f32 %v1313, %v1313
      %v1334 = vmul.f32 %v1316, %v1316
      %vm1335 = vcmask 130048
      %v1336 = vsel %vm1335, %v1319, 0.0
      %1337 = vadd.xlane.f32.xlu0 %v1336
      %v1338 = vpop.xlane.xlu0 %1337
      %v1339 = vsel %vm1335, %v1320, 0.0
      %1340 = vadd.xlane.f32.xlu0 %v1339
      %v1341 = vpop.xlane.xlu0 %1340
      %v1342 = vsel %vm1335, %v1321, 0.0
      %1343 = vadd.xlane.f32.xlu0 %v1342
      %v1344 = vpop.xlane.xlu0 %1343
      %v1345 = vsel %vm1335, %v1322, 0.0
      %1346 = vadd.xlane.f32.xlu0 %v1345
      %v1347 = vpop.xlane.xlu0 %1346
      %v1348 = vsel %vm1335, %v1323, 0.0
      %1349 = vadd.xlane.f32.xlu0 %v1348
      %v1350 = vpop.xlane.xlu0 %1349
      %v1351 = vsel %vm1335, %v1324, 0.0
      %1352 = vadd.xlane.f32.xlu0 %v1351
      %v1353 = vpop.xlane.xlu0 %1352
      %v1354 = vsel %vm1335, %v1325, 0.0
      %1355 = vadd.xlane.f32.xlu0 %v1354
      %v1356 = vpop.xlane.xlu0 %1355
      %v1357 = vsel %vm1335, %v1326, 0.0
      %1358 = vadd.xlane.f32.xlu0 %v1357
      %v1359 = vpop.xlane.xlu0 %1358
      %v1360 = vsel %vm1335, %v1327, 0.0
      %1361 = vadd.xlane.f32.xlu0 %v1360
      %v1362 = vpop.xlane.xlu0 %1361
      %v1363 = vsel %vm1335, %v1328, 0.0
      %1364 = vadd.xlane.f32.xlu0 %v1363
      %v1365 = vpop.xlane.xlu0 %1364
      %v1366 = vsel %vm1335, %v1329, 0.0
      %1367 = vadd.xlane.f32.xlu0 %v1366
      %v1368 = vpop.xlane.xlu0 %1367
      %v1369 = vsel %vm1335, %v1330, 0.0
      %1370 = vadd.xlane.f32.xlu0 %v1369
      %v1371 = vpop.xlane.xlu0 %1370
      %v1372 = vsel %vm1335, %v1331, 0.0
      %1373 = vadd.xlane.f32.xlu0 %v1372
      %v1374 = vpop.xlane.xlu0 %1373
      %v1375 = vsel %vm1335, %v1332, 0.0
      %1376 = vadd.xlane.f32.xlu0 %v1375
      %v1377 = vpop.xlane.xlu0 %1376
      %v1378 = vsel %vm1335, %v1333, 0.0
      %1379 = vadd.xlane.f32.xlu0 %v1378
      %v1380 = vpop.xlane.xlu0 %1379
      %v1381 = vsel %vm1335, %v1334, 0.0
      %1382 = vadd.xlane.f32.xlu0 %v1381
      %v1383 = vpop.xlane.xlu0 %1382
      %v1384 = vsub.f32 %v1338, %v1257
      %v1385 = vsub.f32 %v1341, %v1260
      %v1386 = vsub.f32 %v1344, %v1265
      %v1387 = vsub.f32 %v1347, %v1268
      %v1388 = vsub.f32 %v1350, %v1273
      %v1389 = vsub.f32 %v1353, %v1276
      %v1390 = vsub.f32 %v1356, %v1281
      %v1391 = vsub.f32 %v1359, %v1284
      %v1392 = vsub.f32 %v1362, %v1289
      %v1393 = vsub.f32 %v1365, %v1292
      %v1394 = vsub.f32 %v1368, %v1297
      %v1395 = vsub.f32 %v1371, %v1300
      %v1396 = vsub.f32 %v1374, %v1305
      %v1397 = vsub.f32 %v1377, %v1308
      %v1398 = vsub.f32 %v1380, %v1313
      %v1399 = vsub.f32 %v1383, %v1316
      %v1400 = vmul.f32 %v1384, 0.5
      %v1401 = vmul.f32 %v1385, 0.5
      %v1402 = vmul.f32 %v1386, 0.5
      %v1403 = vmul.f32 %v1387, 0.5
      %v1404 = vmul.f32 %v1388, 0.5
      %v1405 = vmul.f32 %v1389, 0.5
      %v1406 = vmul.f32 %v1390, 0.5
      %v1407 = vmul.f32 %v1391, 0.5
      %v1408 = vmul.f32 %v1392, 0.5
      %v1409 = vmul.f32 %v1393, 0.5
      %v1410 = vmul.f32 %v1394, 0.5
      %v1411 = vmul.f32 %v1395, 0.5
      %v1412 = vmul.f32 %v1396, 0.5
      %v1413 = vmul.f32 %v1397, 0.5
      %v1414 = vmul.f32 %v1398, 0.5
      %v1415 = vmul.f32 %v1399, 0.5
      %s1416 = sld [smem:[#allocation2]]
      %v1417 = vstv %s1416
      %v1418 = vadd.f32 %v1257, %v1417
      %v1419 = vadd.f32 %v1260, %v1417
      %v1420 = vadd.f32 %v1265, %v1417
      %v1421 = vadd.f32 %v1268, %v1417
      %v1422 = vadd.f32 %v1273, %v1417
      %v1423 = vadd.f32 %v1276, %v1417
      %v1424 = vadd.f32 %v1281, %v1417
      %v1425 = vadd.f32 %v1284, %v1417
      %v1426 = vadd.f32 %v1289, %v1417
      %v1427 = vadd.f32 %v1292, %v1417
      %v1428 = vadd.f32 %v1297, %v1417
      %v1429 = vadd.f32 %v1300, %v1417
      %v1430 = vadd.f32 %v1305, %v1417
      %v1431 = vadd.f32 %v1308, %v1417
      %v1432 = vadd.f32 %v1313, %v1417
      %v1433 = vadd.f32 %v1316, %v1417
      %1450 = vrot.lane.b32.xlu0 %v1400, 1
      %v1451 = vpop.permute.xlu0 %1450
      %1452 = vrot.lane.b32.xlu0 %v1401, 1
      %v1453 = vpop.permute.xlu0 %1452
      %1454 = vrot.lane.b32.xlu0 %v1402, 1
      %v1455 = vpop.permute.xlu0 %1454
      %1456 = vrot.lane.b32.xlu0 %v1403, 1
      %v1457 = vpop.permute.xlu0 %1456
      %1458 = vrot.lane.b32.xlu0 %v1404, 1
      %v1459 = vpop.permute.xlu0 %1458
      %1460 = vrot.lane.b32.xlu0 %v1405, 1
      %v1461 = vpop.permute.xlu0 %1460
      %1462 = vrot.lane.b32.xlu0 %v1406, 1
      %v1463 = vpop.permute.xlu0 %1462
      %1464 = vrot.lane.b32.xlu0 %v1407, 1
      %v1465 = vpop.permute.xlu0 %1464
      %1466 = vrot.lane.b32.xlu0 %v1408, 1
      %v1467 = vpop.permute.xlu0 %1466
      %1468 = vrot.lane.b32.xlu0 %v1409, 1
      %v1469 = vpop.permute.xlu0 %1468
      %1470 = vrot.lane.b32.xlu0 %v1410, 1
      %v1471 = vpop.permute.xlu0 %1470
      %1472 = vrot.lane.b32.xlu0 %v1411, 1
      %v1473 = vpop.permute.xlu0 %1472
      %1474 = vrot.lane.b32.xlu0 %v1412, 1
      %v1475 = vpop.permute.xlu0 %1474
      %1476 = vrot.lane.b32.xlu0 %v1413, 1
      %v1477 = vpop.permute.xlu0 %1476
      %1478 = vrot.lane.b32.xlu0 %v1414, 1
      %v1479 = vpop.permute.xlu0 %1478
      %1480 = vrot.lane.b32.xlu0 %v1415, 1
      %v1481 = vpop.permute.xlu0 %1480
      %v1498 = vadd.f32 %v1418, %v1451
      %v1499 = vadd.f32 %v1419, %v1453
      %v1500 = vadd.f32 %v1420, %v1455
      %v1501 = vadd.f32 %v1421, %v1457
      %v1502 = vadd.f32 %v1422, %v1459
      %v1503 = vadd.f32 %v1423, %v1461
      %v1504 = vadd.f32 %v1424, %v1463
      %v1505 = vadd.f32 %v1425, %v1465
      %v1506 = vadd.f32 %v1426, %v1467
      %v1507 = vadd.f32 %v1427, %v1469
      %v1508 = vadd.f32 %v1428, %v1471
      %v1509 = vadd.f32 %v1429, %v1473
      %v1510 = vadd.f32 %v1430, %v1475
      %v1511 = vadd.f32 %v1431, %v1477
      %v1512 = vadd.f32 %v1432, %v1479
      %v1513 = vadd.f32 %v1433, %v1481
      %v1514 = vxor.u32 %v1498, 2147483648
      %v1515 = vxor.u32 %v1499, 2147483648
      %v1516 = vxor.u32 %v1500, 2147483648
      %v1517 = vxor.u32 %v1501, 2147483648
      %v1518 = vxor.u32 %v1502, 2147483648
      %v1519 = vxor.u32 %v1503, 2147483648
      %v1520 = vxor.u32 %v1504, 2147483648
      %v1521 = vxor.u32 %v1505, 2147483648
      %v1522 = vxor.u32 %v1506, 2147483648
      %v1523 = vxor.u32 %v1507, 2147483648
      %v1524 = vxor.u32 %v1508, 2147483648
      %v1525 = vxor.u32 %v1509, 2147483648
      %v1526 = vxor.u32 %v1510, 2147483648
      %v1527 = vxor.u32 %v1511, 2147483648
      %v1528 = vxor.u32 %v1512, 2147483648
      %v1529 = vxor.u32 %v1513, 2147483648
      %v1530 = vmul.f32 %v1514, 1.442695
      %v1531 = vpow.pop %v1530
      %v1532 = vmul.f32 %v1515, 1.442695
      %v1533 = vpow.pop %v1532
      %v1534 = vmul.f32 %v1516, 1.442695
      %v1535 = vpow.pop %v1534
      %v1536 = vmul.f32 %v1517, 1.442695
      %v1537 = vpow.pop %v1536
      %v1538 = vmul.f32 %v1518, 1.442695
      %v1539 = vpow.pop %v1538
      %v1540 = vmul.f32 %v1519, 1.442695
      %v1541 = vpow.pop %v1540
      %v1542 = vmul.f32 %v1520, 1.442695
      %v1543 = vpow.pop %v1542
      %v1544 = vmul.f32 %v1521, 1.442695
      %v1545 = vpow.pop %v1544
      %v1546 = vmul.f32 %v1522, 1.442695
      %v1547 = vpow.pop %v1546
      %v1548 = vmul.f32 %v1523, 1.442695
      %v1549 = vpow.pop %v1548
      %v1550 = vmul.f32 %v1524, 1.442695
      %v1551 = vpow.pop %v1550
      %v1552 = vmul.f32 %v1525, 1.442695
      %v1553 = vpow.pop %v1552
      %v1554 = vmul.f32 %v1526, 1.442695
      %v1555 = vpow.pop %v1554
      %v1556 = vmul.f32 %v1527, 1.442695
      %v1557 = vpow.pop %v1556
      %v1558 = vmul.f32 %v1528, 1.442695
      %v1559 = vpow.pop %v1558
      %v1560 = vmul.f32 %v1529, 1.442695
      %v1561 = vpow.pop %v1560
      %v1562 = vadd.f32 %v1531, 1.0
      %v1563 = vadd.f32 %v1533, 1.0
      %v1564 = vadd.f32 %v1535, 1.0
      %v1565 = vadd.f32 %v1537, 1.0
      %v1566 = vadd.f32 %v1539, 1.0
      %v1567 = vadd.f32 %v1541, 1.0
      %v1568 = vadd.f32 %v1543, 1.0
      %v1569 = vadd.f32 %v1545, 1.0
      %v1570 = vadd.f32 %v1547, 1.0
      %v1571 = vadd.f32 %v1549, 1.0
      %v1572 = vadd.f32 %v1551, 1.0
      %v1573 = vadd.f32 %v1553, 1.0
      %v1574 = vadd.f32 %v1555, 1.0
      %v1575 = vadd.f32 %v1557, 1.0
      %v1576 = vadd.f32 %v1559, 1.0
      %v1577 = vadd.f32 %v1561, 1.0
      %v1578 = vrcp.pop %v1562
      %v1579 = vmul.f32 1.0, %v1578
      %v1580 = vrcp.pop %v1563
      %v1581 = vmul.f32 1.0, %v1580
      %v1582 = vrcp.pop %v1564
      %v1583 = vmul.f32 1.0, %v1582
      %v1584 = vrcp.pop %v1565
      %v1585 = vmul.f32 1.0, %v1584
      %v1586 = vrcp.pop %v1566
      %v1587 = vmul.f32 1.0, %v1586
      %v1588 = vrcp.pop %v1567
      %v1589 = vmul.f32 1.0, %v1588
      %v1590 = vrcp.pop %v1568
      %v1591 = vmul.f32 1.0, %v1590
      %v1592 = vrcp.pop %v1569
      %v1593 = vmul.f32 1.0, %v1592
      %v1594 = vrcp.pop %v1570
      %v1595 = vmul.f32 1.0, %v1594
      %v1596 = vrcp.pop %v1571
      %v1597 = vmul.f32 1.0, %v1596
      %v1598 = vrcp.pop %v1572
      %v1599 = vmul.f32 1.0, %v1598
      %v1600 = vrcp.pop %v1573
      %v1601 = vmul.f32 1.0, %v1600
      %v1602 = vrcp.pop %v1574
      %v1603 = vmul.f32 1.0, %v1602
      %v1604 = vrcp.pop %v1575
      %v1605 = vmul.f32 1.0, %v1604
      %v1606 = vrcp.pop %v1576
      %v1607 = vmul.f32 1.0, %v1606
      %v1608 = vrcp.pop %v1577
      %v1609 = vmul.f32 1.0, %v1608
      %1626 = vrot.lane.b32.xlu0 %v1579, 111
      %v1627 = vpop.permute.xlu0 %1626
      %1628 = vrot.lane.b32.xlu0 %v1581, 111
      %v1629 = vpop.permute.xlu0 %1628
      %1630 = vrot.lane.b32.xlu0 %v1583, 111
      %v1631 = vpop.permute.xlu0 %1630
      %1632 = vrot.lane.b32.xlu0 %v1585, 111
      %v1633 = vpop.permute.xlu0 %1632
      %1634 = vrot.lane.b32.xlu0 %v1587, 111
      %v1635 = vpop.permute.xlu0 %1634
      %1636 = vrot.lane.b32.xlu0 %v1589, 111
      %v1637 = vpop.permute.xlu0 %1636
      %1638 = vrot.lane.b32.xlu0 %v1591, 111
      %v1639 = vpop.permute.xlu0 %1638
      %1640 = vrot.lane.b32.xlu0 %v1593, 111
      %v1641 = vpop.permute.xlu0 %1640
      %1642 = vrot.lane.b32.xlu0 %v1595, 111
      %v1643 = vpop.permute.xlu0 %1642
      %1644 = vrot.lane.b32.xlu0 %v1597, 111
      %v1645 = vpop.permute.xlu0 %1644
      %1646 = vrot.lane.b32.xlu0 %v1599, 111
      %v1647 = vpop.permute.xlu0 %1646
      %1648 = vrot.lane.b32.xlu0 %v1601, 111
      %v1649 = vpop.permute.xlu0 %1648
      %1650 = vrot.lane.b32.xlu0 %v1603, 111
      %v1651 = vpop.permute.xlu0 %1650
      %1652 = vrot.lane.b32.xlu0 %v1605, 111
      %v1653 = vpop.permute.xlu0 %1652
      %1654 = vrot.lane.b32.xlu0 %v1607, 111
      %v1655 = vpop.permute.xlu0 %1654
      %1656 = vrot.lane.b32.xlu0 %v1609, 111
      %v1657 = vpop.permute.xlu0 %1656
      %vm1674 = vcmask 7168
      %1675 = vst.msk [vmem:[%s200] sm:$0xff] %vm1674, %v1627
      %1676 = vst.msk [vmem:[%s200 + $0x8] sm:$0xff] %vm1674, %v1629
      %1677 = vst.msk [vmem:[%s200 + $0x10] sm:$0xff] %vm1674, %v1631
      %1678 = vst.msk [vmem:[%s200 + $0x18] sm:$0xff] %vm1674, %v1633
      %1679 = vst.msk [vmem:[%s200 + $0x20] sm:$0xff] %vm1674, %v1635
      %1680 = vst.msk [vmem:[%s200 + $0x28] sm:$0xff] %vm1674, %v1637
      %1681 = vst.msk [vmem:[%s200 + $0x30] sm:$0xff] %vm1674, %v1639
      %1682 = vst.msk [vmem:[%s200 + $0x38] sm:$0xff] %vm1674, %v1641
      %1683 = vst.msk [vmem:[%s200 + $0x40] sm:$0xff] %vm1674, %v1643
      %1684 = vst.msk [vmem:[%s200 + $0x48] sm:$0xff] %vm1674, %v1645
      %1685 = vst.msk [vmem:[%s200 + $0x50] sm:$0xff] %vm1674, %v1647
      %1686 = vst.msk [vmem:[%s200 + $0x58] sm:$0xff] %vm1674, %v1649
      %1687 = vst.msk [vmem:[%s200 + $0x60] sm:$0xff] %vm1674, %v1651
      %1688 = vst.msk [vmem:[%s200 + $0x68] sm:$0xff] %vm1674, %v1653
      %1689 = vst.msk [vmem:[%s200 + $0x70] sm:$0xff] %vm1674, %v1655
      %1690 = vst.msk [vmem:[%s200 + $0x78] sm:$0xff] %vm1674, %v1657
      %s1691 = smul.u32 16, %s16
      %p1692 = scmp.lt.s32.totalorder %s1691, 31
      %s1693 = scalar_select %p1692, %s1691, 31
      %s1694 = smul.addr %s1693, 8
      %s1695 = scalar_lea.vmem %s4, %s1694
      // Predicated region
      $region37: #{fm_forward.1} parent=35 // pred_check
        %p1696 = pneg %p123
      $region38: #{fm_forward.1} parent=35 // pred_check_branch
        %1698 = sbr.rel (%p1696) target = $region40
      $region39: #{fm_forward.1} parent=35 // pred_region
        %s1699 = smul.u32 16, %s16
      $region40: #{fm_forward.1} parent=35 // pred_fallthru
        _
    $region36: #{fm_forward.1} parent=5 // pred_fallthru
      _
    %p1700 = scmp.le.s32.totalorder 2, %s11
    // Predicated region
    $region41: #{fm_forward.1} parent=5 // pred_check
      %p1701 = pneg %p1700
    $region42: #{fm_forward.1} parent=5 // pred_check_branch
      %1703 = sbr.rel (%p1701) target = $region44
    $region43: #{fm_forward.1} parent=5 // pred_region
      %s1704 = ssub.s32 %s11, 2
      // Predicated region
      $region45: #{fm_forward.1} parent=43 // pred_check
        %p1705 = pneg %p129
      $region46: #{fm_forward.1} parent=43 // pred_check_branch
        %1707 = sbr.rel (%p1705) target = $region48
      $region47: #{fm_forward.1} parent=43 // pred_region
        %s1708 = smul.u32 16, %s17
        %p1709 = scmp.lt.s32.totalorder %s1708, 31
        %s1710 = scalar_select %p1709, %s1708, 31
        %s1711 = smul.addr %s1710, 8
        %s1712 = scalar_lea.vmem %s4, %s1711
      $region48: #{fm_forward.1} parent=43 // pred_fallthru
        _
    $region44: #{fm_forward.1} parent=5 // pred_fallthru
      _
  $region6: #{fm_forward.1} parent=0 // loop_footer
    %s15 = sadd.s32 1, %s11
  $region7: #{fm_forward.1} parent=0 // loop_footer_branch
    %10 = sbr.rel target = $region3
  $region8: #{fm_forward.1} parent=0 // loop_exit
    _

</llo_original>
